<compile_context>
chip_gen: v7x
topology: tpu7x:2x2x1
jax: 0.10.0
libtpu: 0.0.40
codegen_flags: <defaults>
</compile_context>

<pallas_src>
import jax
import jax.numpy as jnp
from jax.experimental import pallas as pl
from jax.experimental.pallas import tpu as pltpu


# ----------------------------------------------------------------------------
# Fused kernel: per row-tile compute encoded AND decoded.
#   x_ref  : (TM, F_in)
#   wt_ref : (F_in, L)      -- W^T, used by the encode matmul (no in-kernel transpose)
#   w_ref  : (L, F_in)      -- W,   used by the decode matmul
#   be_ref : (1, L)         -- encode bias
#   bd_ref : (1, F_in)      -- decode bias
#   enc_ref: (TM, L)
#   dec_ref: (TM, F_in)
# ----------------------------------------------------------------------------
def autoencoder_kernel(x_ref, wt_ref, w_ref, be_ref, bd_ref, enc_ref, dec_ref):
    x = x_ref[...]                                          # (TM, F_in)

    # encoded = relu(x @ W.T + be)  -- plain [TM,F_in] x [F_in,L] MXU matmul,
    # default precision, fp32 accumulation.
    enc = jnp.dot(x, wt_ref[...], preferred_element_type=jnp.float32)
    enc = jnp.maximum(enc + be_ref[...], 0.0)               # (TM, L), fp32
    enc_ref[...] = enc.astype(enc_ref.dtype)

    # decoded = encoded @ W + bd -- reuse the fp32 ReLU output (never leaves VMEM).
    dec = jnp.dot(enc, w_ref[...], preferred_element_type=jnp.float32)
    dec_ref[...] = (dec + bd_ref[...]).astype(dec_ref.dtype)


# ----------------------------------------------------------------------------
# Row-tile selection: VMEM-capped 512-2048 row tiles, single tile for small M.
# ----------------------------------------------------------------------------
def _pick_row_tile(m, f_in, latent, vmem_budget_bytes=16 << 20):
    # Per-row VMEM bytes for the double-buffered x / enc / dec tiles (fp32).
    # 16 MiB budget leaves headroom under v7x's 32 MiB scoped / 64 MiB physical
    # VMEM for the (single-copy) weights, biases and compiler scratch.
    per_row_bytes = 2 * (2 * f_in + latent) * 4
    vmem_cap = max(8, (vmem_budget_bytes // max(per_row_bytes, 1)) // 8 * 8)

    small_cutoff = max(512, min(vmem_cap, 2048))
    if m <= small_cutoff:
        # Small / demo sizes: one tile -> zero extra per-step pipeline overhead
        # on single-TC chips (v5e/v6e), trivially fits VMEM everywhere.
        return m

    # Large M: 512-2048 row tiles (>=~85% of HBM roofline per measured data),
    # capped by VMEM, and aiming for >=8 grid steps so both v7x cores pipeline.
    cap = min(2048, vmem_cap, max(512, m // 8))
    cap -= cap % 8
    for t in range(cap, 7, -8):
        if m % t == 0:
            return t
    return m  # ragged fallback: single full tile (always a legal block shape)


# ----------------------------------------------------------------------------
# Wrapper: flatten leading dims, tile rows, call the fused kernel.
# ----------------------------------------------------------------------------
def autoencoder_forward(x, weight, encode_bias, decode_bias, *, tm=None):
    *lead, f_in = x.shape
    latent, f_in_w = weight.shape
    assert f_in == f_in_w, "weight in_features must match input last dim"

    m = 1
    for d in lead:
        m *= d
    x2 = x.reshape(m, f_in)                       # free reshape (contiguous)

    if tm is None:
        tm = _pick_row_tile(m, f_in, latent)
    assert m % tm == 0, "row tile must divide the flattened row count"
    grid = (m // tm,)

    wt = jnp.transpose(weight)                    # (F_in, L): one-time, outside kernel
    be = encode_bias.reshape(1, latent)
    bd = decode_bias.reshape(1, f_in)

    cost = pl.CostEstimate(
        flops=4 * m * f_in * latent,              # two matmuls, 2 flops / MAC
        transcendentals=0,
        bytes_accessed=4 * (m * f_in            # read x
                            + 2 * latent * f_in  # read W and W^T (once each)
                            + latent + f_in      # biases
                            + m * latent          # write encoded
                            + m * f_in),          # write decoded
    )

    enc2, dec2 = pl.pallas_call(
        autoencoder_kernel,
        out_shape=(
            jax.ShapeDtypeStruct((m, latent), x.dtype),
            jax.ShapeDtypeStruct((m, f_in), x.dtype),
        ),
        grid_spec=pltpu.PrefetchScalarGridSpec(
            num_scalar_prefetch=0,
            grid=grid,
            in_specs=[
                pl.BlockSpec((tm, f_in), lambda i: (i, 0)),       # x row tile
                pl.BlockSpec((f_in, latent), lambda i: (0, 0)),   # W^T (resident)
                pl.BlockSpec((latent, f_in), lambda i: (0, 0)),   # W   (resident)
                pl.BlockSpec((1, latent), lambda i: (0, 0)),      # encode bias
                pl.BlockSpec((1, f_in), lambda i: (0, 0)),        # decode bias
            ],
            out_specs=(
                pl.BlockSpec((tm, latent), lambda i: (i, 0)),
                pl.BlockSpec((tm, f_in), lambda i: (i, 0)),
            ),
        ),
        compiler_params=pltpu.CompilerParams(dimension_semantics=("parallel",)),
        cost_estimate=cost,
    )(x2, wt, weight, be, bd)

    encoded = enc2.reshape(*lead, latent)
    decoded = dec2.reshape(*lead, f_in)
    return encoded, decoded


# ----------------------------------------------------------------------------
# Pure-JAX reference (mirrors the PyTorch forward) for the correctness check.
# Uses default matmul precision so it exercises the same MXU path as the kernel.
# ----------------------------------------------------------------------------
def reference_forward(x, weight, encode_bias, decode_bias):
    enc = jnp.maximum(jnp.einsum("...i,li->...l", x, weight) + encode_bias, 0.0)
    dec = jnp.einsum("...l,li->...i", enc, weight) + decode_bias
    return enc, dec


if __name__ == "__main__":
    # Small shapes consistent with the module: input (..., in_features),
    # weight (latent_features, in_features). Feature dims chosen lane-dense.
    B, S, F_IN, LATENT = 2, 256, 128, 256

    key = jax.random.PRNGKey(0)
    kx, kw, kb1, kb2 = jax.random.split(key, 4)
    x = jax.random.normal(kx, (B, S, F_IN), dtype=jnp.float32)

    # reset_parameters(): weight ~ U(-stdv, stdv) with stdv = 1/sqrt(in_features).
    stdv = 1.0 / (F_IN ** 0.5)
    weight = jax.random.uniform(kw, (LATENT, F_IN), jnp.float32, -stdv, stdv)
    # PyTorch inits the biases to zero; use small non-zero values here so the
    # bias paths are actually exercised by the correctness check.
    encode_bias = 0.1 * jax.random.normal(kb1, (LATENT,), jnp.float32)
    decode_bias = 0.1 * jax.random.normal(kb2, (F_IN,), jnp.float32)

    enc, dec = jax.jit(autoencoder_forward)(x, weight, encode_bias, decode_bias)
    (enc, dec) = jax.block_until_ready((enc, dec))

    enc_ref, dec_ref = reference_forward(x, weight, encode_bias, decode_bias)
    assert enc.shape == (B, S, LATENT) and enc.dtype == jnp.float32
    assert dec.shape == (B, S, F_IN) and dec.dtype == jnp.float32
    err_e = float(jnp.max(jnp.abs(enc - enc_ref)))
    err_d = float(jnp.max(jnp.abs(dec - dec_ref)))
    # Tolerance accommodates default (bf16-pass) MXU precision on both paths.
    assert err_e < 2e-2 and err_d < 2e-2, f"max abs err enc={err_e} dec={err_d}"
    print("KERNEL_OK")
</pallas_src>

<mosaic_0001>
module attributes {stable_mosaic.version = 11 : i64} {
  func.func @autoencoder_kernel(%arg0: i32, %arg1: memref<512x128xf32, #tpu.memory_space<vmem>>, %arg2: memref<128x256xf32, #tpu.memory_space<vmem>>, %arg3: memref<256x128xf32, #tpu.memory_space<vmem>>, %arg4: memref<1x256xf32, #tpu.memory_space<vmem>>, %arg5: memref<1x128xf32, #tpu.memory_space<vmem>>, %arg6: memref<512x256xf32, #tpu.memory_space<vmem>>, %arg7: memref<512x128xf32, #tpu.memory_space<vmem>>) attributes {dimension_semantics = [#tpu.dimension_semantics<parallel>], iteration_bounds = array<i64: 1>, scalar_prefetch = 0 : i64, scratch_operands = 0 : i64, tpu.core_type = #tpu.core_type<tc>, window_params = [{transform_indices = @transform_0, window_bounds = array<i64: 512, 128>}, {pipeline_mode = #tpu.pipeline_mode<synchronous>, transform_indices = @transform_1, window_bounds = array<i64: 128, 256>}, {pipeline_mode = #tpu.pipeline_mode<synchronous>, transform_indices = @transform_2, window_bounds = array<i64: 256, 128>}, {pipeline_mode = #tpu.pipeline_mode<synchronous>, transform_indices = @transform_3, window_bounds = array<i64: 1, 256>}, {pipeline_mode = #tpu.pipeline_mode<synchronous>, transform_indices = @transform_4, window_bounds = array<i64: 1, 128>}, {transform_indices = @transform_5, window_bounds = array<i64: 512, 256>}, {transform_indices = @transform_6, window_bounds = array<i64: 512, 128>}]} {
    %c0 = arith.constant 0 : index
    %c0_0 = arith.constant 0 : index
    %0 = vector.load %arg1[%c0, %c0_0] : memref<512x128xf32, #tpu.memory_space<vmem>>, vector<512x128xf32>
    %c0_1 = arith.constant 0 : index
    %c0_2 = arith.constant 0 : index
    %1 = vector.load %arg2[%c0_1, %c0_2] : memref<128x256xf32, #tpu.memory_space<vmem>>, vector<128x256xf32>
    %cst = arith.constant dense<0.000000e+00> : vector<512x256xf32>
    %2 = tpu.matmul %0, %1, %cst {dimension_numbers = #tpu.dot_dimension_numbers<[1], [0], [0], [1], [0, 0, 1, 1], [], []>} : vector<512x128xf32>, vector<128x256xf32>, vector<512x256xf32> -> vector<512x256xf32>
    %c0_3 = arith.constant 0 : index
    %c0_4 = arith.constant 0 : index
    %3 = vector.load %arg4[%c0_3, %c0_4] : memref<1x256xf32, #tpu.memory_space<vmem>>, vector<1x256xf32>
    %4 = vector.broadcast %3 : vector<1x256xf32> to vector<512x256xf32>
    %5 = arith.addf %2, %4 : vector<512x256xf32>
    %cst_5 = arith.constant 0.000000e+00 : f32
    %6 = vector.broadcast %cst_5 : f32 to vector<512x256xf32>
    %7 = arith.maximumf %5, %6 : vector<512x256xf32>
    %c0_6 = arith.constant 0 : index
    %c0_7 = arith.constant 0 : index
    %8 = vector.load %arg6[%c0_6, %c0_7] : memref<512x256xf32, #tpu.memory_space<vmem>>, vector<512x256xf32>
    tpu.vector_store %arg6[%c0_6, %c0_7], %7 {strides = array<i32>} : memref<512x256xf32, #tpu.memory_space<vmem>>, vector<512x256xf32>,
    %c0_8 = arith.constant 0 : index
    %c0_9 = arith.constant 0 : index
    %9 = vector.load %arg3[%c0_8, %c0_9] : memref<256x128xf32, #tpu.memory_space<vmem>>, vector<256x128xf32>
    %cst_10 = arith.constant dense<0.000000e+00> : vector<512x128xf32>
    %10 = tpu.matmul %7, %9, %cst_10 {dimension_numbers = #tpu.dot_dimension_numbers<[1], [0], [0], [1], [0, 0, 1, 1], [], []>} : vector<512x256xf32>, vector<256x128xf32>, vector<512x128xf32> -> vector<512x128xf32>
    %c0_11 = arith.constant 0 : index
    %c0_12 = arith.constant 0 : index
    %11 = vector.load %arg5[%c0_11, %c0_12] : memref<1x128xf32, #tpu.memory_space<vmem>>, vector<1x128xf32>
    %12 = vector.broadcast %11 : vector<1x128xf32> to vector<512x128xf32>
    %13 = arith.addf %10, %12 : vector<512x128xf32>
    %c0_13 = arith.constant 0 : index
    %c0_14 = arith.constant 0 : index
    %14 = vector.load %arg7[%c0_13, %c0_14] : memref<512x128xf32, #tpu.memory_space<vmem>>, vector<512x128xf32>
    tpu.vector_store %arg7[%c0_13, %c0_14], %13 {strides = array<i32>} : memref<512x128xf32, #tpu.memory_space<vmem>>, vector<512x128xf32>,
    return
  }
  func.func @transform_0(%arg0: i32) -> (i32, i32) {
    %c0_i32 = arith.constant 0 : i32
    %c0_i32_0 = arith.constant 0 : i32
    return %arg0, %c0_i32 : i32, i32
  }
  func.func @transform_1(%arg0: i32) -> (i32, i32) {
    %c0_i32 = arith.constant 0 : i32
    %c0_i32_0 = arith.constant 0 : i32
    %c0_i32_1 = arith.constant 0 : i32
    return %c0_i32, %c0_i32_0 : i32, i32
  }
  func.func @transform_2(%arg0: i32) -> (i32, i32) {
    %c0_i32 = arith.constant 0 : i32
    %c0_i32_0 = arith.constant 0 : i32
    %c0_i32_1 = arith.constant 0 : i32
    return %c0_i32, %c0_i32_0 : i32, i32
  }
  func.func @transform_3(%arg0: i32) -> (i32, i32) {
    %c0_i32 = arith.constant 0 : i32
    %c0_i32_0 = arith.constant 0 : i32
    %c0_i32_1 = arith.constant 0 : i32
    return %c0_i32, %c0_i32_0 : i32, i32
  }
  func.func @transform_4(%arg0: i32) -> (i32, i32) {
    %c0_i32 = arith.constant 0 : i32
    %c0_i32_0 = arith.constant 0 : i32
    %c0_i32_1 = arith.constant 0 : i32
    return %c0_i32, %c0_i32_0 : i32, i32
  }
  func.func @transform_5(%arg0: i32) -> (i32, i32) {
    %c0_i32 = arith.constant 0 : i32
    %c0_i32_0 = arith.constant 0 : i32
    return %arg0, %c0_i32 : i32, i32
  }
  func.func @transform_6(%arg0: i32) -> (i32, i32) {
    %c0_i32 = arith.constant 0 : i32
    %c0_i32_0 = arith.constant 0 : i32
    return %arg0, %c0_i32 : i32, i32
  }
}

</mosaic_0001>

<llo_original>
// kernel: autoencoder_forward.1
$region0: #{autoencoder_forward.1}
  #allocation0 [shape = 'u32[]', space=smem, size = 0x4, offset = 0x4, fixed_abs, tag = 'smem constant byte address 0x4 - core index']
  #allocation1 [shape = 'u32[144,128]{1,0:T(1,128)}', space=vmem, size = 0x12000, scoped, tag = 'internal scratch']
  %s0 = inlined_call_operand.hbm [shape: f32[512,128], index: 0, kind: input, shape index: {}]
  %s1 = inlined_call_operand.vmem [shape: f32[128,256], index: 1, kind: input, shape index: {}]
  %s2 = inlined_call_operand.vmem [shape: f32[256,128], index: 2, kind: input, shape index: {}]
  %s3 = inlined_call_operand.vmem [shape: f32[1,256], index: 3, kind: input, shape index: {}]
  %s4 = inlined_call_operand.vmem [shape: f32[1,128], index: 4, kind: input, shape index: {}]
  %s5 = inlined_call_operand.hbm [shape: f32[512,256], index: 5, kind: output, shape index: {0}]
  %s6 = inlined_call_operand.hbm [shape: f32[512,128], index: 6, kind: output, shape index: {1}]
  %7 = xla_tuple %s5, %s6
  %s8 = sld [smem:[#allocation0]]
  $region42: #{autoencoder_forward.1} parent=0
    _
  %s10 = ssub.s32 1, %s8
  %s11 = scalar_select 0, %s10, %s8
  $region1: #{autoencoder_forward.1} parent=0
    #allocation2 [shape = 'u8[262144]{0}', space=vmem, size = 0x40000, scoped, tag = 'input window, operand 0, single buffered']
    #allocation3 [shape = 's32[1]{0}', space=sflag, size = 0x4, scoped, tag = 'scoped memory for autoencoder_forward.1']
    #allocation4 [shape = 's32[1]{0}', space=sflag, size = 0x4, scoped, tag = 'scoped memory for autoencoder_forward.1']
    #allocation5 [shape = 'u8[524288]{0}', space=vmem, size = 0x80000, scoped, tag = 'output window, operand 0, single buffered']
    #allocation6 [shape = 'u8[262144]{0}', space=vmem, size = 0x40000, scoped, tag = 'output window, operand 1, single buffered']
    #allocation7 [shape = 's32[1]{0}', space=sflag, size = 0x4, scoped, tag = 'scoped memory for autoencoder_forward.1']
    %12 = vsyncpa [#allocation3], 0
    %13 = vsyncpa [#allocation4], 0
    %14 = vsyncpa [#allocation7], 0
    // Predicated region
    $region2: #{autoencoder_forward.1} parent=1 // pred_check
      _
    $region3: #{autoencoder_forward.1} parent=1 // pred_check_branch
      %16 = sbr.rel (0) target = $region5
    $region4: #{autoencoder_forward.1} parent=1 // pred_region
      %s18 = ssub.s32 8192, 8192
      %19 = vsyncadd [#allocation3], %s18
      %s20 = sshll.u32 [#allocation2], 4
      %s21 = int_to_ptr.vmem [resolvable:$true] %s20
      %26 = dma.hbm_to_vmem [thread:$0]  %s0, 8192, %s21, [#allocation3], 128, 128, 8
    $region5: #{autoencoder_forward.1} parent=1 // pred_fallthru
      _
    // Predicated region
    $region6: #{autoencoder_forward.1} parent=1 // pred_check
      _
    $region7: #{autoencoder_forward.1} parent=1 // pred_check_branch
      %28 = sbr.rel (0) target = $region9
    $region8: #{autoencoder_forward.1} parent=1 // pred_region
      _
    $region9: #{autoencoder_forward.1} parent=1 // pred_fallthru
      _
    // Predicated region
    $region10: #{autoencoder_forward.1} parent=1 // pred_check
      _
    $region11: #{autoencoder_forward.1} parent=1 // pred_check_branch
      %30 = sbr.rel (0) target = $region13
    $region12: #{autoencoder_forward.1} parent=1 // pred_region
      _
    $region13: #{autoencoder_forward.1} parent=1 // pred_fallthru
      _
    // Predicated region
    $region14: #{autoencoder_forward.1} parent=1 // pred_check
      _
    $region15: #{autoencoder_forward.1} parent=1 // pred_check_branch
      %32 = sbr.rel (0) target = $region17
    $region16: #{autoencoder_forward.1} parent=1 // pred_region
      _
    $region17: #{autoencoder_forward.1} parent=1 // pred_fallthru
      _
    // Predicated region
    $region18: #{autoencoder_forward.1} parent=1 // pred_check
      _
    $region19: #{autoencoder_forward.1} parent=1 // pred_check_branch
      %34 = sbr.rel (0) target = $region21
    $region20: #{autoencoder_forward.1} parent=1 // pred_region
      _
    $region21: #{autoencoder_forward.1} parent=1 // pred_fallthru
      _
    // Predicated region
    $region22: #{autoencoder_forward.1} parent=1 // pred_check
      _
    $region23: #{autoencoder_forward.1} parent=1 // pred_check_branch
      %36 = sbr.rel (0) target = $region25
    $region24: #{autoencoder_forward.1} parent=1 // pred_region
      %37 = dma.done [#allocation3], 8192
    $region25: #{autoencoder_forward.1} parent=1 // pred_fallthru
      _
    %v38 = vld [vmem:[#allocation2] sm:$0xff]
    %v39 = vld [vmem:[#allocation2 + $0x8] sm:$0xff]
    %v40 = vld [vmem:[#allocation2 + $0x10] sm:$0xff]
    %v41 = vld [vmem:[#allocation2 + $0x18] sm:$0xff]
    %v42 = vld [vmem:[#allocation2 + $0x20] sm:$0xff]
    %v43 = vld [vmem:[#allocation2 + $0x28] sm:$0xff]
    %v44 = vld [vmem:[#allocation2 + $0x30] sm:$0xff]
    %v45 = vld [vmem:[#allocation2 + $0x38] sm:$0xff]
    %v46 = vld [vmem:[#allocation2 + $0x40] sm:$0xff]
    %v47 = vld [vmem:[#allocation2 + $0x48] sm:$0xff]
    %v48 = vld [vmem:[#allocation2 + $0x50] sm:$0xff]
    %v49 = vld [vmem:[#allocation2 + $0x58] sm:$0xff]
    %v50 = vld [vmem:[#allocation2 + $0x60] sm:$0xff]
    %v51 = vld [vmem:[#allocation2 + $0x68] sm:$0xff]
    %v52 = vld [vmem:[#allocation2 + $0x70] sm:$0xff]
    %v53 = vld [vmem:[#allocation2 + $0x78] sm:$0xff]
    %v54 = vld [vmem:[#allocation2 + $0x80] sm:$0xff]
    %v55 = vld [vmem:[#allocation2 + $0x88] sm:$0xff]
    %v56 = vld [vmem:[#allocation2 + $0x90] sm:$0xff]
    %v57 = vld [vmem:[#allocation2 + $0x98] sm:$0xff]
    %v58 = vld [vmem:[#allocation2 + $0xa0] sm:$0xff]
    %v59 = vld [vmem:[#allocation2 + $0xa8] sm:$0xff]
    %v60 = vld [vmem:[#allocation2 + $0xb0] sm:$0xff]
    %v61 = vld [vmem:[#allocation2 + $0xb8] sm:$0xff]
    %v62 = vld [vmem:[#allocation2 + $0xc0] sm:$0xff]
    %v63 = vld [vmem:[#allocation2 + $0xc8] sm:$0xff]
    %v64 = vld [vmem:[#allocation2 + $0xd0] sm:$0xff]
    %v65 = vld [vmem:[#allocation2 + $0xd8] sm:$0xff]
    %v66 = vld [vmem:[#allocation2 + $0xe0] sm:$0xff]
    %v67 = vld [vmem:[#allocation2 + $0xe8] sm:$0xff]
    %v68 = vld [vmem:[#allocation2 + $0xf0] sm:$0xff]
    %v69 = vld [vmem:[#allocation2 + $0xf8] sm:$0xff]
    %v70 = vld [vmem:[#allocation2 + $0x100] sm:$0xff]
    %v71 = vld [vmem:[#allocation2 + $0x108] sm:$0xff]
    %v72 = vld [vmem:[#allocation2 + $0x110] sm:$0xff]
    %v73 = vld [vmem:[#allocation2 + $0x118] sm:$0xff]
    %v74 = vld [vmem:[#allocation2 + $0x120] sm:$0xff]
    %v75 = vld [vmem:[#allocation2 + $0x128] sm:$0xff]
    %v76 = vld [vmem:[#allocation2 + $0x130] sm:$0xff]
    %v77 = vld [vmem:[#allocation2 + $0x138] sm:$0xff]
    %v78 = vld [vmem:[#allocation2 + $0x140] sm:$0xff]
    %v79 = vld [vmem:[#allocation2 + $0x148] sm:$0xff]
    %v80 = vld [vmem:[#allocation2 + $0x150] sm:$0xff]
    %v81 = vld [vmem:[#allocation2 + $0x158] sm:$0xff]
    %v82 = vld [vmem:[#allocation2 + $0x160] sm:$0xff]
    %v83 = vld [vmem:[#allocation2 + $0x168] sm:$0xff]
    %v84 = vld [vmem:[#allocation2 + $0x170] sm:$0xff]
    %v85 = vld [vmem:[#allocation2 + $0x178] sm:$0xff]
    %v86 = vld [vmem:[#allocation2 + $0x180] sm:$0xff]
    %v87 = vld [vmem:[#allocation2 + $0x188] sm:$0xff]
    %v88 = vld [vmem:[#allocation2 + $0x190] sm:$0xff]
    %v89 = vld [vmem:[#allocation2 + $0x198] sm:$0xff]
    %v90 = vld [vmem:[#allocation2 + $0x1a0] sm:$0xff]
    %v91 = vld [vmem:[#allocation2 + $0x1a8] sm:$0xff]
    %v92 = vld [vmem:[#allocation2 + $0x1b0] sm:$0xff]
    %v93 = vld [vmem:[#allocation2 + $0x1b8] sm:$0xff]
    %v94 = vld [vmem:[#allocation2 + $0x1c0] sm:$0xff]
    %v95 = vld [vmem:[#allocation2 + $0x1c8] sm:$0xff]
    %v96 = vld [vmem:[#allocation2 + $0x1d0] sm:$0xff]
    %v97 = vld [vmem:[#allocation2 + $0x1d8] sm:$0xff]
    %v98 = vld [vmem:[#allocation2 + $0x1e0] sm:$0xff]
    %v99 = vld [vmem:[#allocation2 + $0x1e8] sm:$0xff]
    %v100 = vld [vmem:[#allocation2 + $0x1f0] sm:$0xff]
    %v101 = vld [vmem:[#allocation2 + $0x1f8] sm:$0xff]
    %v102 = vld [vmem:[%s1] sm:$0xff]
    %v103 = vld [vmem:[%s1 + $0x8] sm:$0xff]
    %v104 = vld [vmem:[%s1 + $0x10] sm:$0xff]
    %v105 = vld [vmem:[%s1 + $0x18] sm:$0xff]
    %v106 = vld [vmem:[%s1 + $0x20] sm:$0xff]
    %v107 = vld [vmem:[%s1 + $0x28] sm:$0xff]
    %v108 = vld [vmem:[%s1 + $0x30] sm:$0xff]
    %v109 = vld [vmem:[%s1 + $0x38] sm:$0xff]
    %v110 = vld [vmem:[%s1 + $0x40] sm:$0xff]
    %v111 = vld [vmem:[%s1 + $0x48] sm:$0xff]
    %v112 = vld [vmem:[%s1 + $0x50] sm:$0xff]
    %v113 = vld [vmem:[%s1 + $0x58] sm:$0xff]
    %v114 = vld [vmem:[%s1 + $0x60] sm:$0xff]
    %v115 = vld [vmem:[%s1 + $0x68] sm:$0xff]
    %v116 = vld [vmem:[%s1 + $0x70] sm:$0xff]
    %v117 = vld [vmem:[%s1 + $0x78] sm:$0xff]
    %v118 = vld [vmem:[%s1 + $0x80] sm:$0xff]
    %v119 = vld [vmem:[%s1 + $0x88] sm:$0xff]
    %v120 = vld [vmem:[%s1 + $0x90] sm:$0xff]
    %v121 = vld [vmem:[%s1 + $0x98] sm:$0xff]
    %v122 = vld [vmem:[%s1 + $0xa0] sm:$0xff]
    %v123 = vld [vmem:[%s1 + $0xa8] sm:$0xff]
    %v124 = vld [vmem:[%s1 + $0xb0] sm:$0xff]
    %v125 = vld [vmem:[%s1 + $0xb8] sm:$0xff]
    %v126 = vld [vmem:[%s1 + $0xc0] sm:$0xff]
    %v127 = vld [vmem:[%s1 + $0xc8] sm:$0xff]
    %v128 = vld [vmem:[%s1 + $0xd0] sm:$0xff]
    %v129 = vld [vmem:[%s1 + $0xd8] sm:$0xff]
    %v130 = vld [vmem:[%s1 + $0xe0] sm:$0xff]
    %v131 = vld [vmem:[%s1 + $0xe8] sm:$0xff]
    %v132 = vld [vmem:[%s1 + $0xf0] sm:$0xff]
    %v133 = vld [vmem:[%s1 + $0xf8] sm:$0xff]
    %v134 = vld [vmem:[%s3] sm:$0x3]
    %v136 = vlaneseq
    %v137 = vshrl.u32 %v136, 7
    %v138 = vsub.s32 0, %v137
    %v139 = vrot.slane %v134, %v138
    %v140 = vlaneseq
    %v141 = vshrl.u32 %v140, 7
    %v142 = vsub.s32 1, %v141
    %v143 = vrot.slane %v134, %v142
    %146 = vmatprep.subr.mxu0 %v103
    %147 = vmatpush1.msra.mxu0 %v102
    %148 = vmatprep.subr.mxu0 %v105
    %149 = vmatpush1.msra.mxu0 %v104
    %150 = vmatprep.subr.mxu0 %v107
    %151 = vmatpush1.msra.mxu0 %v106
    %152 = vmatprep.subr.mxu0 %v109
    %153 = vmatpush1.msra.mxu0 %v108
    %154 = vmatprep.subr.mxu0 %v111
    %155 = vmatpush1.msra.mxu0 %v110
    %156 = vmatprep.subr.mxu0 %v113
    %157 = vmatpush1.msra.mxu0 %v112
    %158 = vmatprep.subr.mxu0 %v115
    %159 = vmatpush1.msra.mxu0 %v114
    %160 = vmatprep.subr.mxu0 %v117
    %161 = vmatpush1.msra.mxu0 %v116
    %162 = vmatprep.subr.mxu0 %v119
    %163 = vmatpush1.msra.mxu0 %v118
    %164 = vmatprep.subr.mxu0 %v121
    %165 = vmatpush1.msra.mxu0 %v120
    %166 = vmatprep.subr.mxu0 %v123
    %167 = vmatpush1.msra.mxu0 %v122
    %168 = vmatprep.subr.mxu0 %v125
    %169 = vmatpush1.msra.mxu0 %v124
    %170 = vmatprep.subr.mxu0 %v127
    %171 = vmatpush1.msra.mxu0 %v126
    %172 = vmatprep.subr.mxu0 %v129
    %173 = vmatpush1.msra.mxu0 %v128
    %174 = vmatprep.subr.mxu0 %v131
    %175 = vmatpush1.msra.mxu0 %v130
    %176 = vmatprep.subr.mxu0 %v133
    %177 = vmatpush1.msra.mxu0 %v132
    %178 = vmatprep.subr.mxu0 0.0
    %179 = vmatpush1.msra.mxu0 0.0
    %180 = vmatprep.subr.mxu0 0.0
    %181 = vmatpush1.msra.mxu0 0.0
    %182 = vmatprep.subr.mxu0 0.0
    %183 = vmatpush1.msra.mxu0 0.0
    %184 = vmatprep.subr.mxu0 0.0
    %185 = vmatpush1.msra.mxu0 0.0
    %186 = vmatprep.subr.mxu0 0.0
    %187 = vmatpush1.msra.mxu0 0.0
    %188 = vmatprep.subr.mxu0 0.0
    %189 = vmatpush1.msra.mxu0 0.0
    %190 = vmatprep.subr.mxu0 0.0
    %191 = vmatpush1.msra.mxu0 0.0
    %192 = vmatprep.subr.mxu0 0.0
    %193 = vmatpush1.msra.mxu0 0.0
    %194 = vmatprep.subr.mxu0 0.0
    %195 = vmatpush1.msra.mxu0 0.0
    %196 = vmatprep.subr.mxu0 0.0
    %197 = vmatpush1.msra.mxu0 0.0
    %198 = vmatprep.subr.mxu0 0.0
    %199 = vmatpush1.msra.mxu0 0.0
    %200 = vmatprep.subr.mxu0 0.0
    %201 = vmatpush1.msra.mxu0 0.0
    %202 = vmatprep.subr.mxu0 0.0
    %203 = vmatpush1.msra.mxu0 0.0
    %204 = vmatprep.subr.mxu0 0.0
    %205 = vmatpush1.msra.mxu0 0.0
    %206 = vmatprep.subr.mxu0 0.0
    %207 = vmatpush1.msra.mxu0 0.0
    %208 = vmatprep.subr.mxu0 0.0
    %209 = vmatpush1.msra.mxu0 0.0
    %210 = vmatprep.mubr.f32.mxu0 0.0
    %211 = vmatmul.mubr.f32.gmra.mrb[0].mxu0 %v38
    %v212 = vpop.f32.mrb[0].mxu0
    %v213 = vadd.f32 %v139, %v212
    %v214 = vpop.f32.mrb[0].mxu0
    %v215 = vadd.f32 %v143, %v214
    %216 = vmatprep.mubr.f32.mxu0 0.0
    %217 = vmatmul.mubr.f32.gmra.mrb[0].mxu0 %v39
    %v218 = vpop.f32.mrb[0].mxu0
    %v219 = vadd.f32 %v139, %v218
    %v220 = vpop.f32.mrb[0].mxu0
    %v221 = vadd.f32 %v143, %v220
    %222 = vmatprep.mubr.f32.mxu0 0.0
    %223 = vmatmul.mubr.f32.gmra.mrb[0].mxu0 %v40
    %v224 = vpop.f32.mrb[0].mxu0
    %v225 = vadd.f32 %v139, %v224
    %v226 = vpop.f32.mrb[0].mxu0
    %v227 = vadd.f32 %v143, %v226
    %228 = vmatprep.mubr.f32.mxu0 0.0
    %229 = vmatmul.mubr.f32.gmra.mrb[0].mxu0 %v41
    %v230 = vpop.f32.mrb[0].mxu0
    %v231 = vadd.f32 %v139, %v230
    %v232 = vpop.f32.mrb[0].mxu0
    %v233 = vadd.f32 %v143, %v232
    %234 = vmatprep.mubr.f32.mxu0 0.0
    %235 = vmatmul.mubr.f32.gmra.mrb[0].mxu0 %v42
    %v236 = vpop.f32.mrb[0].mxu0
    %v237 = vadd.f32 %v139, %v236
    %v238 = vpop.f32.mrb[0].mxu0
    %v239 = vadd.f32 %v143, %v238
    %240 = vmatprep.mubr.f32.mxu0 0.0
    %241 = vmatmul.mubr.f32.gmra.mrb[0].mxu0 %v43
    %v242 = vpop.f32.mrb[0].mxu0
    %v243 = vadd.f32 %v139, %v242
    %v244 = vpop.f32.mrb[0].mxu0
    %v245 = vadd.f32 %v143, %v244
    %246 = vmatprep.mubr.f32.mxu0 0.0
    %247 = vmatmul.mubr.f32.gmra.mrb[0].mxu0 %v44
    %v248 = vpop.f32.mrb[0].mxu0
    %v249 = vadd.f32 %v139, %v248
    %v250 = vpop.f32.mrb[0].mxu0
    %v251 = vadd.f32 %v143, %v250
    %252 = vmatprep.mubr.f32.mxu0 0.0
    %253 = vmatmul.mubr.f32.gmra.mrb[0].mxu0 %v45
    %v254 = vpop.f32.mrb[0].mxu0
    %v255 = vadd.f32 %v139, %v254
    %v256 = vpop.f32.mrb[0].mxu0
    %v257 = vadd.f32 %v143, %v256
    %258 = vmatprep.mubr.f32.mxu0 0.0
    %259 = vmatmul.mubr.f32.gmra.mrb[0].mxu0 %v46
    %v260 = vpop.f32.mrb[0].mxu0
    %v261 = vadd.f32 %v139, %v260
    %v262 = vpop.f32.mrb[0].mxu0
    %v263 = vadd.f32 %v143, %v262
    %264 = vmatprep.mubr.f32.mxu0 0.0
    %265 = vmatmul.mubr.f32.gmra.mrb[0].mxu0 %v47
    %v266 = vpop.f32.mrb[0].mxu0
    %v267 = vadd.f32 %v139, %v266
    %v268 = vpop.f32.mrb[0].mxu0
    %v269 = vadd.f32 %v143, %v268
    %270 = vmatprep.mubr.f32.mxu0 0.0
    %271 = vmatmul.mubr.f32.gmra.mrb[0].mxu0 %v48
    %v272 = vpop.f32.mrb[0].mxu0
    %v273 = vadd.f32 %v139, %v272
    %v274 = vpop.f32.mrb[0].mxu0
    %v275 = vadd.f32 %v143, %v274
    %276 = vmatprep.mubr.f32.mxu0 0.0
    %277 = vmatmul.mubr.f32.gmra.mrb[0].mxu0 %v49
    %v278 = vpop.f32.mrb[0].mxu0
    %v279 = vadd.f32 %v139, %v278
    %v280 = vpop.f32.mrb[0].mxu0
    %v281 = vadd.f32 %v143, %v280
    %282 = vmatprep.mubr.f32.mxu0 0.0
    %283 = vmatmul.mubr.f32.gmra.mrb[0].mxu0 %v50
    %v284 = vpop.f32.mrb[0].mxu0
    %v285 = vadd.f32 %v139, %v284
    %v286 = vpop.f32.mrb[0].mxu0
    %v287 = vadd.f32 %v143, %v286
    %288 = vmatprep.mubr.f32.mxu0 0.0
    %289 = vmatmul.mubr.f32.gmra.mrb[0].mxu0 %v51
    %v290 = vpop.f32.mrb[0].mxu0
    %v291 = vadd.f32 %v139, %v290
    %v292 = vpop.f32.mrb[0].mxu0
    %v293 = vadd.f32 %v143, %v292
    %294 = vmatprep.mubr.f32.mxu0 0.0
    %295 = vmatmul.mubr.f32.gmra.mrb[0].mxu0 %v52
    %v296 = vpop.f32.mrb[0].mxu0
    %v297 = vadd.f32 %v139, %v296
    %v298 = vpop.f32.mrb[0].mxu0
    %v299 = vadd.f32 %v143, %v298
    %300 = vmatprep.mubr.f32.mxu0 0.0
    %301 = vmatmul.mubr.f32.gmra.mrb[0].mxu0 %v53
    %v302 = vpop.f32.mrb[0].mxu0
    %v303 = vadd.f32 %v139, %v302
    %v304 = vpop.f32.mrb[0].mxu0
    %v305 = vadd.f32 %v143, %v304
    %306 = vmatprep.mubr.f32.mxu0 0.0
    %307 = vmatmul.mubr.f32.gmra.mrb[0].mxu0 %v54
    %v308 = vpop.f32.mrb[0].mxu0
    %v309 = vadd.f32 %v139, %v308
    %v310 = vpop.f32.mrb[0].mxu0
    %v311 = vadd.f32 %v143, %v310
    %312 = vmatprep.mubr.f32.mxu0 0.0
    %313 = vmatmul.mubr.f32.gmra.mrb[0].mxu0 %v55
    %v314 = vpop.f32.mrb[0].mxu0
    %v315 = vadd.f32 %v139, %v314
    %v316 = vpop.f32.mrb[0].mxu0
    %v317 = vadd.f32 %v143, %v316
    %318 = vmatprep.mubr.f32.mxu0 0.0
    %319 = vmatmul.mubr.f32.gmra.mrb[0].mxu0 %v56
    %v320 = vpop.f32.mrb[0].mxu0
    %v321 = vadd.f32 %v139, %v320
    %v322 = vpop.f32.mrb[0].mxu0
    %v323 = vadd.f32 %v143, %v322
    %324 = vmatprep.mubr.f32.mxu0 0.0
    %325 = vmatmul.mubr.f32.gmra.mrb[0].mxu0 %v57
    %v326 = vpop.f32.mrb[0].mxu0
    %v327 = vadd.f32 %v139, %v326
    %v328 = vpop.f32.mrb[0].mxu0
    %v329 = vadd.f32 %v143, %v328
    %330 = vmatprep.mubr.f32.mxu0 0.0
    %331 = vmatmul.mubr.f32.gmra.mrb[0].mxu0 %v58
    %v332 = vpop.f32.mrb[0].mxu0
    %v333 = vadd.f32 %v139, %v332
    %v334 = vpop.f32.mrb[0].mxu0
    %v335 = vadd.f32 %v143, %v334
    %336 = vmatprep.mubr.f32.mxu0 0.0
    %337 = vmatmul.mubr.f32.gmra.mrb[0].mxu0 %v59
    %v338 = vpop.f32.mrb[0].mxu0
    %v339 = vadd.f32 %v139, %v338
    %v340 = vpop.f32.mrb[0].mxu0
    %v341 = vadd.f32 %v143, %v340
    %342 = vmatprep.mubr.f32.mxu0 0.0
    %343 = vmatmul.mubr.f32.gmra.mrb[0].mxu0 %v60
    %v344 = vpop.f32.mrb[0].mxu0
    %v345 = vadd.f32 %v139, %v344
    %v346 = vpop.f32.mrb[0].mxu0
    %v347 = vadd.f32 %v143, %v346
    %348 = vmatprep.mubr.f32.mxu0 0.0
    %349 = vmatmul.mubr.f32.gmra.mrb[0].mxu0 %v61
    %v350 = vpop.f32.mrb[0].mxu0
    %v351 = vadd.f32 %v139, %v350
    %v352 = vpop.f32.mrb[0].mxu0
    %v353 = vadd.f32 %v143, %v352
    %354 = vmatprep.mubr.f32.mxu0 0.0
    %355 = vmatmul.mubr.f32.gmra.mrb[0].mxu0 %v62
    %v356 = vpop.f32.mrb[0].mxu0
    %v357 = vadd.f32 %v139, %v356
    %v358 = vpop.f32.mrb[0].mxu0
    %v359 = vadd.f32 %v143, %v358
    %360 = vmatprep.mubr.f32.mxu0 0.0
    %361 = vmatmul.mubr.f32.gmra.mrb[0].mxu0 %v63
    %v362 = vpop.f32.mrb[0].mxu0
    %v363 = vadd.f32 %v139, %v362
    %v364 = vpop.f32.mrb[0].mxu0
    %v365 = vadd.f32 %v143, %v364
    %366 = vmatprep.mubr.f32.mxu0 0.0
    %367 = vmatmul.mubr.f32.gmra.mrb[0].mxu0 %v64
    %v368 = vpop.f32.mrb[0].mxu0
    %v369 = vadd.f32 %v139, %v368
    %v370 = vpop.f32.mrb[0].mxu0
    %v371 = vadd.f32 %v143, %v370
    %372 = vmatprep.mubr.f32.mxu0 0.0
    %373 = vmatmul.mubr.f32.gmra.mrb[0].mxu0 %v65
    %v374 = vpop.f32.mrb[0].mxu0
    %v375 = vadd.f32 %v139, %v374
    %v376 = vpop.f32.mrb[0].mxu0
    %v377 = vadd.f32 %v143, %v376
    %378 = vmatprep.mubr.f32.mxu0 0.0
    %379 = vmatmul.mubr.f32.gmra.mrb[0].mxu0 %v66
    %v380 = vpop.f32.mrb[0].mxu0
    %v381 = vadd.f32 %v139, %v380
    %v382 = vpop.f32.mrb[0].mxu0
    %v383 = vadd.f32 %v143, %v382
    %384 = vmatprep.mubr.f32.mxu0 0.0
    %385 = vmatmul.mubr.f32.gmra.mrb[0].mxu0 %v67
    %v386 = vpop.f32.mrb[0].mxu0
    %v387 = vadd.f32 %v139, %v386
    %v388 = vpop.f32.mrb[0].mxu0
    %v389 = vadd.f32 %v143, %v388
    %390 = vmatprep.mubr.f32.mxu0 0.0
    %391 = vmatmul.mubr.f32.gmra.mrb[0].mxu0 %v68
    %v392 = vpop.f32.mrb[0].mxu0
    %v393 = vadd.f32 %v139, %v392
    %v394 = vpop.f32.mrb[0].mxu0
    %v395 = vadd.f32 %v143, %v394
    %396 = vmatprep.mubr.f32.mxu0 0.0
    %397 = vmatmul.mubr.f32.gmra.mrb[0].mxu0 %v69
    %v398 = vpop.f32.mrb[0].mxu0
    %v399 = vadd.f32 %v139, %v398
    %v400 = vpop.f32.mrb[0].mxu0
    %v401 = vadd.f32 %v143, %v400
    %402 = vmatprep.mubr.f32.mxu0 0.0
    %403 = vmatmul.mubr.f32.gmra.mrb[0].mxu0 %v70
    %v404 = vpop.f32.mrb[0].mxu0
    %v405 = vadd.f32 %v139, %v404
    %v406 = vpop.f32.mrb[0].mxu0
    %v407 = vadd.f32 %v143, %v406
    %408 = vmatprep.mubr.f32.mxu0 0.0
    %409 = vmatmul.mubr.f32.gmra.mrb[0].mxu0 %v71
    %v410 = vpop.f32.mrb[0].mxu0
    %v411 = vadd.f32 %v139, %v410
    %v412 = vpop.f32.mrb[0].mxu0
    %v413 = vadd.f32 %v143, %v412
    %414 = vmatprep.mubr.f32.mxu0 0.0
    %415 = vmatmul.mubr.f32.gmra.mrb[0].mxu0 %v72
    %v416 = vpop.f32.mrb[0].mxu0
    %v417 = vadd.f32 %v139, %v416
    %v418 = vpop.f32.mrb[0].mxu0
    %v419 = vadd.f32 %v143, %v418
    %420 = vmatprep.mubr.f32.mxu0 0.0
    %421 = vmatmul.mubr.f32.gmra.mrb[0].mxu0 %v73
    %v422 = vpop.f32.mrb[0].mxu0
    %v423 = vadd.f32 %v139, %v422
    %v424 = vpop.f32.mrb[0].mxu0
    %v425 = vadd.f32 %v143, %v424
    %426 = vmatprep.mubr.f32.mxu0 0.0
    %427 = vmatmul.mubr.f32.gmra.mrb[0].mxu0 %v74
    %v428 = vpop.f32.mrb[0].mxu0
    %v429 = vadd.f32 %v139, %v428
    %v430 = vpop.f32.mrb[0].mxu0
    %v431 = vadd.f32 %v143, %v430
    %432 = vmatprep.mubr.f32.mxu0 0.0
    %433 = vmatmul.mubr.f32.gmra.mrb[0].mxu0 %v75
    %v434 = vpop.f32.mrb[0].mxu0
    %v435 = vadd.f32 %v139, %v434
    %v436 = vpop.f32.mrb[0].mxu0
    %v437 = vadd.f32 %v143, %v436
    %438 = vmatprep.mubr.f32.mxu0 0.0
    %439 = vmatmul.mubr.f32.gmra.mrb[0].mxu0 %v76
    %v440 = vpop.f32.mrb[0].mxu0
    %v441 = vadd.f32 %v139, %v440
    %v442 = vpop.f32.mrb[0].mxu0
    %v443 = vadd.f32 %v143, %v442
    %444 = vmatprep.mubr.f32.mxu0 0.0
    %445 = vmatmul.mubr.f32.gmra.mrb[0].mxu0 %v77
    %v446 = vpop.f32.mrb[0].mxu0
    %v447 = vadd.f32 %v139, %v446
    %v448 = vpop.f32.mrb[0].mxu0
    %v449 = vadd.f32 %v143, %v448
    %450 = vmatprep.mubr.f32.mxu0 0.0
    %451 = vmatmul.mubr.f32.gmra.mrb[0].mxu0 %v78
    %v452 = vpop.f32.mrb[0].mxu0
    %v453 = vadd.f32 %v139, %v452
    %v454 = vpop.f32.mrb[0].mxu0
    %v455 = vadd.f32 %v143, %v454
    %456 = vmatprep.mubr.f32.mxu0 0.0
    %457 = vmatmul.mubr.f32.gmra.mrb[0].mxu0 %v79
    %v458 = vpop.f32.mrb[0].mxu0
    %v459 = vadd.f32 %v139, %v458
    %v460 = vpop.f32.mrb[0].mxu0
    %v461 = vadd.f32 %v143, %v460
    %462 = vmatprep.mubr.f32.mxu0 0.0
    %463 = vmatmul.mubr.f32.gmra.mrb[0].mxu0 %v80
    %v464 = vpop.f32.mrb[0].mxu0
    %v465 = vadd.f32 %v139, %v464
    %v466 = vpop.f32.mrb[0].mxu0
    %v467 = vadd.f32 %v143, %v466
    %468 = vmatprep.mubr.f32.mxu0 0.0
    %469 = vmatmul.mubr.f32.gmra.mrb[0].mxu0 %v81
    %v470 = vpop.f32.mrb[0].mxu0
    %v471 = vadd.f32 %v139, %v470
    %v472 = vpop.f32.mrb[0].mxu0
    %v473 = vadd.f32 %v143, %v472
    %474 = vmatprep.mubr.f32.mxu0 0.0
    %475 = vmatmul.mubr.f32.gmra.mrb[0].mxu0 %v82
    %v476 = vpop.f32.mrb[0].mxu0
    %v477 = vadd.f32 %v139, %v476
    %v478 = vpop.f32.mrb[0].mxu0
    %v479 = vadd.f32 %v143, %v478
    %480 = vmatprep.mubr.f32.mxu0 0.0
    %481 = vmatmul.mubr.f32.gmra.mrb[0].mxu0 %v83
    %v482 = vpop.f32.mrb[0].mxu0
    %v483 = vadd.f32 %v139, %v482
    %v484 = vpop.f32.mrb[0].mxu0
    %v485 = vadd.f32 %v143, %v484
    %486 = vmatprep.mubr.f32.mxu0 0.0
    %487 = vmatmul.mubr.f32.gmra.mrb[0].mxu0 %v84
    %v488 = vpop.f32.mrb[0].mxu0
    %v489 = vadd.f32 %v139, %v488
    %v490 = vpop.f32.mrb[0].mxu0
    %v491 = vadd.f32 %v143, %v490
    %492 = vmatprep.mubr.f32.mxu0 0.0
    %493 = vmatmul.mubr.f32.gmra.mrb[0].mxu0 %v85
    %v494 = vpop.f32.mrb[0].mxu0
    %v495 = vadd.f32 %v139, %v494
    %v496 = vpop.f32.mrb[0].mxu0
    %v497 = vadd.f32 %v143, %v496
    %498 = vmatprep.mubr.f32.mxu0 0.0
    %499 = vmatmul.mubr.f32.gmra.mrb[0].mxu0 %v86
    %v500 = vpop.f32.mrb[0].mxu0
    %v501 = vadd.f32 %v139, %v500
    %v502 = vpop.f32.mrb[0].mxu0
    %v503 = vadd.f32 %v143, %v502
    %504 = vmatprep.mubr.f32.mxu0 0.0
    %505 = vmatmul.mubr.f32.gmra.mrb[0].mxu0 %v87
    %v506 = vpop.f32.mrb[0].mxu0
    %v507 = vadd.f32 %v139, %v506
    %v508 = vpop.f32.mrb[0].mxu0
    %v509 = vadd.f32 %v143, %v508
    %510 = vmatprep.mubr.f32.mxu0 0.0
    %511 = vmatmul.mubr.f32.gmra.mrb[0].mxu0 %v88
    %v512 = vpop.f32.mrb[0].mxu0
    %v513 = vadd.f32 %v139, %v512
    %v514 = vpop.f32.mrb[0].mxu0
    %v515 = vadd.f32 %v143, %v514
    %516 = vmatprep.mubr.f32.mxu0 0.0
    %517 = vmatmul.mubr.f32.gmra.mrb[0].mxu0 %v89
    %v518 = vpop.f32.mrb[0].mxu0
    %v519 = vadd.f32 %v139, %v518
    %v520 = vpop.f32.mrb[0].mxu0
    %v521 = vadd.f32 %v143, %v520
    %522 = vmatprep.mubr.f32.mxu0 0.0
    %523 = vmatmul.mubr.f32.gmra.mrb[0].mxu0 %v90
    %v524 = vpop.f32.mrb[0].mxu0
    %v525 = vadd.f32 %v139, %v524
    %v526 = vpop.f32.mrb[0].mxu0
    %v527 = vadd.f32 %v143, %v526
    %528 = vmatprep.mubr.f32.mxu0 0.0
    %529 = vmatmul.mubr.f32.gmra.mrb[0].mxu0 %v91
    %v530 = vpop.f32.mrb[0].mxu0
    %v531 = vadd.f32 %v139, %v530
    %v532 = vpop.f32.mrb[0].mxu0
    %v533 = vadd.f32 %v143, %v532
    %534 = vmatprep.mubr.f32.mxu0 0.0
    %535 = vmatmul.mubr.f32.gmra.mrb[0].mxu0 %v92
    %v536 = vpop.f32.mrb[0].mxu0
    %v537 = vadd.f32 %v139, %v536
    %v538 = vpop.f32.mrb[0].mxu0
    %v539 = vadd.f32 %v143, %v538
    %540 = vmatprep.mubr.f32.mxu0 0.0
    %541 = vmatmul.mubr.f32.gmra.mrb[0].mxu0 %v93
    %v542 = vpop.f32.mrb[0].mxu0
    %v543 = vadd.f32 %v139, %v542
    %v544 = vpop.f32.mrb[0].mxu0
    %v545 = vadd.f32 %v143, %v544
    %546 = vmatprep.mubr.f32.mxu0 0.0
    %547 = vmatmul.mubr.f32.gmra.mrb[0].mxu0 %v94
    %v548 = vpop.f32.mrb[0].mxu0
    %v549 = vadd.f32 %v139, %v548
    %v550 = vpop.f32.mrb[0].mxu0
    %v551 = vadd.f32 %v143, %v550
    %552 = vmatprep.mubr.f32.mxu0 0.0
    %553 = vmatmul.mubr.f32.gmra.mrb[0].mxu0 %v95
    %v554 = vpop.f32.mrb[0].mxu0
    %v555 = vadd.f32 %v139, %v554
    %v556 = vpop.f32.mrb[0].mxu0
    %v557 = vadd.f32 %v143, %v556
    %558 = vmatprep.mubr.f32.mxu0 0.0
    %559 = vmatmul.mubr.f32.gmra.mrb[0].mxu0 %v96
    %v560 = vpop.f32.mrb[0].mxu0
    %v561 = vadd.f32 %v139, %v560
    %v562 = vpop.f32.mrb[0].mxu0
    %v563 = vadd.f32 %v143, %v562
    %564 = vmatprep.mubr.f32.mxu0 0.0
    %565 = vmatmul.mubr.f32.gmra.mrb[0].mxu0 %v97
    %v566 = vpop.f32.mrb[0].mxu0
    %v567 = vadd.f32 %v139, %v566
    %v568 = vpop.f32.mrb[0].mxu0
    %v569 = vadd.f32 %v143, %v568
    %570 = vmatprep.mubr.f32.mxu0 0.0
    %571 = vmatmul.mubr.f32.gmra.mrb[0].mxu0 %v98
    %v572 = vpop.f32.mrb[0].mxu0
    %v573 = vadd.f32 %v139, %v572
    %v574 = vpop.f32.mrb[0].mxu0
    %v575 = vadd.f32 %v143, %v574
    %576 = vmatprep.mubr.f32.mxu0 0.0
    %577 = vmatmul.mubr.f32.gmra.mrb[0].mxu0 %v99
    %v578 = vpop.f32.mrb[0].mxu0
    %v579 = vadd.f32 %v139, %v578
    %v580 = vpop.f32.mrb[0].mxu0
    %v581 = vadd.f32 %v143, %v580
    %582 = vmatprep.mubr.f32.mxu0 0.0
    %583 = vmatmul.mubr.f32.gmra.mrb[0].mxu0 %v100
    %v584 = vpop.f32.mrb[0].mxu0
    %v585 = vadd.f32 %v139, %v584
    %v586 = vpop.f32.mrb[0].mxu0
    %v587 = vadd.f32 %v143, %v586
    %588 = vmatprep.mubr.f32.mxu0 0.0
    %589 = vmatmul.mubr.f32.gmra.mrb[0].mxu0 %v101
    %v590 = vpop.f32.mrb[0].mxu0
    %v591 = vadd.f32 %v139, %v590
    %v592 = vpop.f32.mrb[0].mxu0
    %v593 = vadd.f32 %v143, %v592
    %594 = vdwg.mxu0
    %v595 = vmax.f32 %v213, 0.0
    %v596 = vmax.f32 %v215, 0.0
    %v597 = vmax.f32 %v219, 0.0
    %v598 = vmax.f32 %v221, 0.0
    %v599 = vmax.f32 %v225, 0.0
    %v600 = vmax.f32 %v227, 0.0
    %v601 = vmax.f32 %v231, 0.0
    %v602 = vmax.f32 %v233, 0.0
    %v603 = vmax.f32 %v237, 0.0
    %v604 = vmax.f32 %v239, 0.0
    %v605 = vmax.f32 %v243, 0.0
    %v606 = vmax.f32 %v245, 0.0
    %v607 = vmax.f32 %v249, 0.0
    %v608 = vmax.f32 %v251, 0.0
    %v609 = vmax.f32 %v255, 0.0
    %v610 = vmax.f32 %v257, 0.0
    %v611 = vmax.f32 %v261, 0.0
    %v612 = vmax.f32 %v263, 0.0
    %v613 = vmax.f32 %v267, 0.0
    %v614 = vmax.f32 %v269, 0.0
    %v615 = vmax.f32 %v273, 0.0
    %v616 = vmax.f32 %v275, 0.0
    %v617 = vmax.f32 %v279, 0.0
    %v618 = vmax.f32 %v281, 0.0
    %v619 = vmax.f32 %v285, 0.0
    %v620 = vmax.f32 %v287, 0.0
    %v621 = vmax.f32 %v291, 0.0
    %v622 = vmax.f32 %v293, 0.0
    %v623 = vmax.f32 %v297, 0.0
    %v624 = vmax.f32 %v299, 0.0
    %v625 = vmax.f32 %v303, 0.0
    %v626 = vmax.f32 %v305, 0.0
    %v627 = vmax.f32 %v309, 0.0
    %v628 = vmax.f32 %v311, 0.0
    %v629 = vmax.f32 %v315, 0.0
    %v630 = vmax.f32 %v317, 0.0
    %v631 = vmax.f32 %v321, 0.0
    %v632 = vmax.f32 %v323, 0.0
    %v633 = vmax.f32 %v327, 0.0
    %v634 = vmax.f32 %v329, 0.0
    %v635 = vmax.f32 %v333, 0.0
    %v636 = vmax.f32 %v335, 0.0
    %v637 = vmax.f32 %v339, 0.0
    %v638 = vmax.f32 %v341, 0.0
    %v639 = vmax.f32 %v345, 0.0
    %v640 = vmax.f32 %v347, 0.0
    %v641 = vmax.f32 %v351, 0.0
    %v642 = vmax.f32 %v353, 0.0
    %v643 = vmax.f32 %v357, 0.0
    %v644 = vmax.f32 %v359, 0.0
    %v645 = vmax.f32 %v363, 0.0
    %v646 = vmax.f32 %v365, 0.0
    %v647 = vmax.f32 %v369, 0.0
    %v648 = vmax.f32 %v371, 0.0
    %v649 = vmax.f32 %v375, 0.0
    %v650 = vmax.f32 %v377, 0.0
    %v651 = vmax.f32 %v381, 0.0
    %v652 = vmax.f32 %v383, 0.0
    %v653 = vmax.f32 %v387, 0.0
    %v654 = vmax.f32 %v389, 0.0
    %v655 = vmax.f32 %v393, 0.0
    %v656 = vmax.f32 %v395, 0.0
    %v657 = vmax.f32 %v399, 0.0
    %v658 = vmax.f32 %v401, 0.0
    %v659 = vmax.f32 %v405, 0.0
    %v660 = vmax.f32 %v407, 0.0
    %v661 = vmax.f32 %v411, 0.0
    %v662 = vmax.f32 %v413, 0.0
    %v663 = vmax.f32 %v417, 0.0
    %v664 = vmax.f32 %v419, 0.0
    %v665 = vmax.f32 %v423, 0.0
    %v666 = vmax.f32 %v425, 0.0
    %v667 = vmax.f32 %v429, 0.0
    %v668 = vmax.f32 %v431, 0.0
    %v669 = vmax.f32 %v435, 0.0
    %v670 = vmax.f32 %v437, 0.0
    %v671 = vmax.f32 %v441, 0.0
    %v672 = vmax.f32 %v443, 0.0
    %v673 = vmax.f32 %v447, 0.0
    %v674 = vmax.f32 %v449, 0.0
    %v675 = vmax.f32 %v453, 0.0
    %v676 = vmax.f32 %v455, 0.0
    %v677 = vmax.f32 %v459, 0.0
    %v678 = vmax.f32 %v461, 0.0
    %v679 = vmax.f32 %v465, 0.0
    %v680 = vmax.f32 %v467, 0.0
    %v681 = vmax.f32 %v471, 0.0
    %v682 = vmax.f32 %v473, 0.0
    %v683 = vmax.f32 %v477, 0.0
    %v684 = vmax.f32 %v479, 0.0
    %v685 = vmax.f32 %v483, 0.0
    %v686 = vmax.f32 %v485, 0.0
    %v687 = vmax.f32 %v489, 0.0
    %v688 = vmax.f32 %v491, 0.0
    %v689 = vmax.f32 %v495, 0.0
    %v690 = vmax.f32 %v497, 0.0
    %v691 = vmax.f32 %v501, 0.0
    %v692 = vmax.f32 %v503, 0.0
    %v693 = vmax.f32 %v507, 0.0
    %v694 = vmax.f32 %v509, 0.0
    %v695 = vmax.f32 %v513, 0.0
    %v696 = vmax.f32 %v515, 0.0
    %v697 = vmax.f32 %v519, 0.0
    %v698 = vmax.f32 %v521, 0.0
    %v699 = vmax.f32 %v525, 0.0
    %v700 = vmax.f32 %v527, 0.0
    %v701 = vmax.f32 %v531, 0.0
    %v702 = vmax.f32 %v533, 0.0
    %v703 = vmax.f32 %v537, 0.0
    %v704 = vmax.f32 %v539, 0.0
    %v705 = vmax.f32 %v543, 0.0
    %v706 = vmax.f32 %v545, 0.0
    %v707 = vmax.f32 %v549, 0.0
    %v708 = vmax.f32 %v551, 0.0
    %v709 = vmax.f32 %v555, 0.0
    %v710 = vmax.f32 %v557, 0.0
    %v711 = vmax.f32 %v561, 0.0
    %v712 = vmax.f32 %v563, 0.0
    %v713 = vmax.f32 %v567, 0.0
    %v714 = vmax.f32 %v569, 0.0
    %v715 = vmax.f32 %v573, 0.0
    %v716 = vmax.f32 %v575, 0.0
    %v717 = vmax.f32 %v579, 0.0
    %v718 = vmax.f32 %v581, 0.0
    %v719 = vmax.f32 %v585, 0.0
    %v720 = vmax.f32 %v587, 0.0
    %v721 = vmax.f32 %v591, 0.0
    %v722 = vmax.f32 %v593, 0.0
    %723 = vst [vmem:[#allocation5] sm:$0xff] %v595
    %724 = vst [vmem:[#allocation5 + $0x8] sm:$0xff] %v596
    %725 = vst [vmem:[#allocation5 + $0x10] sm:$0xff] %v597
    %726 = vst [vmem:[#allocation5 + $0x18] sm:$0xff] %v598
    %727 = vst [vmem:[#allocation5 + $0x20] sm:$0xff] %v599
    %728 = vst [vmem:[#allocation5 + $0x28] sm:$0xff] %v600
    %729 = vst [vmem:[#allocation5 + $0x30] sm:$0xff] %v601
    %730 = vst [vmem:[#allocation5 + $0x38] sm:$0xff] %v602
    %731 = vst [vmem:[#allocation5 + $0x40] sm:$0xff] %v603
    %732 = vst [vmem:[#allocation5 + $0x48] sm:$0xff] %v604
    %733 = vst [vmem:[#allocation5 + $0x50] sm:$0xff] %v605
    %734 = vst [vmem:[#allocation5 + $0x58] sm:$0xff] %v606
    %735 = vst [vmem:[#allocation5 + $0x60] sm:$0xff] %v607
    %736 = vst [vmem:[#allocation5 + $0x68] sm:$0xff] %v608
    %737 = vst [vmem:[#allocation5 + $0x70] sm:$0xff] %v609
    %738 = vst [vmem:[#allocation5 + $0x78] sm:$0xff] %v610
    %739 = vst [vmem:[#allocation5 + $0x80] sm:$0xff] %v611
    %740 = vst [vmem:[#allocation5 + $0x88] sm:$0xff] %v612
    %741 = vst [vmem:[#allocation5 + $0x90] sm:$0xff] %v613
    %742 = vst [vmem:[#allocation5 + $0x98] sm:$0xff] %v614
    %743 = vst [vmem:[#allocation5 + $0xa0] sm:$0xff] %v615
    %744 = vst [vmem:[#allocation5 + $0xa8] sm:$0xff] %v616
    %745 = vst [vmem:[#allocation5 + $0xb0] sm:$0xff] %v617
    %746 = vst [vmem:[#allocation5 + $0xb8] sm:$0xff] %v618
    %747 = vst [vmem:[#allocation5 + $0xc0] sm:$0xff] %v619
    %748 = vst [vmem:[#allocation5 + $0xc8] sm:$0xff] %v620
    %749 = vst [vmem:[#allocation5 + $0xd0] sm:$0xff] %v621
    %750 = vst [vmem:[#allocation5 + $0xd8] sm:$0xff] %v622
    %751 = vst [vmem:[#allocation5 + $0xe0] sm:$0xff] %v623
    %752 = vst [vmem:[#allocation5 + $0xe8] sm:$0xff] %v624
    %753 = vst [vmem:[#allocation5 + $0xf0] sm:$0xff] %v625
    %754 = vst [vmem:[#allocation5 + $0xf8] sm:$0xff] %v626
    %755 = vst [vmem:[#allocation5 + $0x100] sm:$0xff] %v627
    %756 = vst [vmem:[#allocation5 + $0x108] sm:$0xff] %v628
    %757 = vst [vmem:[#allocation5 + $0x110] sm:$0xff] %v629
    %758 = vst [vmem:[#allocation5 + $0x118] sm:$0xff] %v630
    %759 = vst [vmem:[#allocation5 + $0x120] sm:$0xff] %v631
    %760 = vst [vmem:[#allocation5 + $0x128] sm:$0xff] %v632
    %761 = vst [vmem:[#allocation5 + $0x130] sm:$0xff] %v633
    %762 = vst [vmem:[#allocation5 + $0x138] sm:$0xff] %v634
    %763 = vst [vmem:[#allocation5 + $0x140] sm:$0xff] %v635
    %764 = vst [vmem:[#allocation5 + $0x148] sm:$0xff] %v636
    %765 = vst [vmem:[#allocation5 + $0x150] sm:$0xff] %v637
    %766 = vst [vmem:[#allocation5 + $0x158] sm:$0xff] %v638
    %767 = vst [vmem:[#allocation5 + $0x160] sm:$0xff] %v639
    %768 = vst [vmem:[#allocation5 + $0x168] sm:$0xff] %v640
    %769 = vst [vmem:[#allocation5 + $0x170] sm:$0xff] %v641
    %770 = vst [vmem:[#allocation5 + $0x178] sm:$0xff] %v642
    %771 = vst [vmem:[#allocation5 + $0x180] sm:$0xff] %v643
    %772 = vst [vmem:[#allocation5 + $0x188] sm:$0xff] %v644
    %773 = vst [vmem:[#allocation5 + $0x190] sm:$0xff] %v645
    %774 = vst [vmem:[#allocation5 + $0x198] sm:$0xff] %v646
    %775 = vst [vmem:[#allocation5 + $0x1a0] sm:$0xff] %v647
    %776 = vst [vmem:[#allocation5 + $0x1a8] sm:$0xff] %v648
    %777 = vst [vmem:[#allocation5 + $0x1b0] sm:$0xff] %v649
    %778 = vst [vmem:[#allocation5 + $0x1b8] sm:$0xff] %v650
    %779 = vst [vmem:[#allocation5 + $0x1c0] sm:$0xff] %v651
    %780 = vst [vmem:[#allocation5 + $0x1c8] sm:$0xff] %v652
    %781 = vst [vmem:[#allocation5 + $0x1d0] sm:$0xff] %v653
    %782 = vst [vmem:[#allocation5 + $0x1d8] sm:$0xff] %v654
    %783 = vst [vmem:[#allocation5 + $0x1e0] sm:$0xff] %v655
    %784 = vst [vmem:[#allocation5 + $0x1e8] sm:$0xff] %v656
    %785 = vst [vmem:[#allocation5 + $0x1f0] sm:$0xff] %v657
    %786 = vst [vmem:[#allocation5 + $0x1f8] sm:$0xff] %v658
    %787 = vst [vmem:[#allocation5 + $0x200] sm:$0xff] %v659
    %788 = vst [vmem:[#allocation5 + $0x208] sm:$0xff] %v660
    %789 = vst [vmem:[#allocation5 + $0x210] sm:$0xff] %v661
    %790 = vst [vmem:[#allocation5 + $0x218] sm:$0xff] %v662
    %791 = vst [vmem:[#allocation5 + $0x220] sm:$0xff] %v663
    %792 = vst [vmem:[#allocation5 + $0x228] sm:$0xff] %v664
    %793 = vst [vmem:[#allocation5 + $0x230] sm:$0xff] %v665
    %794 = vst [vmem:[#allocation5 + $0x238] sm:$0xff] %v666
    %795 = vst [vmem:[#allocation5 + $0x240] sm:$0xff] %v667
    %796 = vst [vmem:[#allocation5 + $0x248] sm:$0xff] %v668
    %797 = vst [vmem:[#allocation5 + $0x250] sm:$0xff] %v669
    %798 = vst [vmem:[#allocation5 + $0x258] sm:$0xff] %v670
    %799 = vst [vmem:[#allocation5 + $0x260] sm:$0xff] %v671
    %800 = vst [vmem:[#allocation5 + $0x268] sm:$0xff] %v672
    %801 = vst [vmem:[#allocation5 + $0x270] sm:$0xff] %v673
    %802 = vst [vmem:[#allocation5 + $0x278] sm:$0xff] %v674
    %803 = vst [vmem:[#allocation5 + $0x280] sm:$0xff] %v675
    %804 = vst [vmem:[#allocation5 + $0x288] sm:$0xff] %v676
    %805 = vst [vmem:[#allocation5 + $0x290] sm:$0xff] %v677
    %806 = vst [vmem:[#allocation5 + $0x298] sm:$0xff] %v678
    %807 = vst [vmem:[#allocation5 + $0x2a0] sm:$0xff] %v679
    %808 = vst [vmem:[#allocation5 + $0x2a8] sm:$0xff] %v680
    %809 = vst [vmem:[#allocation5 + $0x2b0] sm:$0xff] %v681
    %810 = vst [vmem:[#allocation5 + $0x2b8] sm:$0xff] %v682
    %811 = vst [vmem:[#allocation5 + $0x2c0] sm:$0xff] %v683
    %812 = vst [vmem:[#allocation5 + $0x2c8] sm:$0xff] %v684
    %813 = vst [vmem:[#allocation5 + $0x2d0] sm:$0xff] %v685
    %814 = vst [vmem:[#allocation5 + $0x2d8] sm:$0xff] %v686
    %815 = vst [vmem:[#allocation5 + $0x2e0] sm:$0xff] %v687
    %816 = vst [vmem:[#allocation5 + $0x2e8] sm:$0xff] %v688
    %817 = vst [vmem:[#allocation5 + $0x2f0] sm:$0xff] %v689
    %818 = vst [vmem:[#allocation5 + $0x2f8] sm:$0xff] %v690
    %819 = vst [vmem:[#allocation5 + $0x300] sm:$0xff] %v691
    %820 = vst [vmem:[#allocation5 + $0x308] sm:$0xff] %v692
    %821 = vst [vmem:[#allocation5 + $0x310] sm:$0xff] %v693
    %822 = vst [vmem:[#allocation5 + $0x318] sm:$0xff] %v694
    %823 = vst [vmem:[#allocation5 + $0x320] sm:$0xff] %v695
    %824 = vst [vmem:[#allocation5 + $0x328] sm:$0xff] %v696
    %825 = vst [vmem:[#allocation5 + $0x330] sm:$0xff] %v697
    %826 = vst [vmem:[#allocation5 + $0x338] sm:$0xff] %v698
    %827 = vst [vmem:[#allocation5 + $0x340] sm:$0xff] %v699
    %828 = vst [vmem:[#allocation5 + $0x348] sm:$0xff] %v700
    %829 = vst [vmem:[#allocation5 + $0x350] sm:$0xff] %v701
    %830 = vst [vmem:[#allocation5 + $0x358] sm:$0xff] %v702
    %831 = vst [vmem:[#allocation5 + $0x360] sm:$0xff] %v703
    %832 = vst [vmem:[#allocation5 + $0x368] sm:$0xff] %v704
    %833 = vst [vmem:[#allocation5 + $0x370] sm:$0xff] %v705
    %834 = vst [vmem:[#allocation5 + $0x378] sm:$0xff] %v706
    %835 = vst [vmem:[#allocation5 + $0x380] sm:$0xff] %v707
    %836 = vst [vmem:[#allocation5 + $0x388] sm:$0xff] %v708
    %837 = vst [vmem:[#allocation5 + $0x390] sm:$0xff] %v709
    %838 = vst [vmem:[#allocation5 + $0x398] sm:$0xff] %v710
    %839 = vst [vmem:[#allocation5 + $0x3a0] sm:$0xff] %v711
    %840 = vst [vmem:[#allocation5 + $0x3a8] sm:$0xff] %v712
    %841 = vst [vmem:[#allocation5 + $0x3b0] sm:$0xff] %v713
    %842 = vst [vmem:[#allocation5 + $0x3b8] sm:$0xff] %v714
    %843 = vst [vmem:[#allocation5 + $0x3c0] sm:$0xff] %v715
    %844 = vst [vmem:[#allocation5 + $0x3c8] sm:$0xff] %v716
    %845 = vst [vmem:[#allocation5 + $0x3d0] sm:$0xff] %v717
    %846 = vst [vmem:[#allocation5 + $0x3d8] sm:$0xff] %v718
    %847 = vst [vmem:[#allocation5 + $0x3e0] sm:$0xff] %v719
    %848 = vst [vmem:[#allocation5 + $0x3e8] sm:$0xff] %v720
    %849 = vst [vmem:[#allocation5 + $0x3f0] sm:$0xff] %v721
    %850 = vst [vmem:[#allocation5 + $0x3f8] sm:$0xff] %v722
    %v851 = vld [vmem:[%s2] sm:$0xff]
    %v852 = vld [vmem:[%s2 + $0x8] sm:$0xff]
    %v853 = vld [vmem:[%s2 + $0x10] sm:$0xff]
    %v854 = vld [vmem:[%s2 + $0x18] sm:$0xff]
    %v855 = vld [vmem:[%s2 + $0x20] sm:$0xff]
    %v856 = vld [vmem:[%s2 + $0x28] sm:$0xff]
    %v857 = vld [vmem:[%s2 + $0x30] sm:$0xff]
    %v858 = vld [vmem:[%s2 + $0x38] sm:$0xff]
    %v859 = vld [vmem:[%s2 + $0x40] sm:$0xff]
    %v860 = vld [vmem:[%s2 + $0x48] sm:$0xff]
    %v861 = vld [vmem:[%s2 + $0x50] sm:$0xff]
    %v862 = vld [vmem:[%s2 + $0x58] sm:$0xff]
    %v863 = vld [vmem:[%s2 + $0x60] sm:$0xff]
    %v864 = vld [vmem:[%s2 + $0x68] sm:$0xff]
    %v865 = vld [vmem:[%s2 + $0x70] sm:$0xff]
    %v866 = vld [vmem:[%s2 + $0x78] sm:$0xff]
    %v867 = vld [vmem:[%s2 + $0x80] sm:$0xff]
    %v868 = vld [vmem:[%s2 + $0x88] sm:$0xff]
    %v869 = vld [vmem:[%s2 + $0x90] sm:$0xff]
    %v870 = vld [vmem:[%s2 + $0x98] sm:$0xff]
    %v871 = vld [vmem:[%s2 + $0xa0] sm:$0xff]
    %v872 = vld [vmem:[%s2 + $0xa8] sm:$0xff]
    %v873 = vld [vmem:[%s2 + $0xb0] sm:$0xff]
    %v874 = vld [vmem:[%s2 + $0xb8] sm:$0xff]
    %v875 = vld [vmem:[%s2 + $0xc0] sm:$0xff]
    %v876 = vld [vmem:[%s2 + $0xc8] sm:$0xff]
    %v877 = vld [vmem:[%s2 + $0xd0] sm:$0xff]
    %v878 = vld [vmem:[%s2 + $0xd8] sm:$0xff]
    %v879 = vld [vmem:[%s2 + $0xe0] sm:$0xff]
    %v880 = vld [vmem:[%s2 + $0xe8] sm:$0xff]
    %v881 = vld [vmem:[%s2 + $0xf0] sm:$0xff]
    %v882 = vld [vmem:[%s2 + $0xf8] sm:$0xff]
    %v883 = vld [vmem:[%s4] sm:$0x1]
    %v885 = vlaneseq
    %v886 = vshrl.u32 %v885, 7
    %v887 = vsub.s32 0, %v886
    %v888 = vrot.slane %v883, %v887
    %890 = vmatprep.subr.mxu0 0.0
    %891 = vmatpush1.msra.mxu0 %v851
    %892 = vmatprep.subr.mxu0 0.0
    %893 = vmatpush1.msra.mxu0 %v852
    %894 = vmatprep.subr.mxu0 0.0
    %895 = vmatpush1.msra.mxu0 %v853
    %896 = vmatprep.subr.mxu0 0.0
    %897 = vmatpush1.msra.mxu0 %v854
    %898 = vmatprep.subr.mxu0 0.0
    %899 = vmatpush1.msra.mxu0 %v855
    %900 = vmatprep.subr.mxu0 0.0
    %901 = vmatpush1.msra.mxu0 %v856
    %902 = vmatprep.subr.mxu0 0.0
    %903 = vmatpush1.msra.mxu0 %v857
    %904 = vmatprep.subr.mxu0 0.0
    %905 = vmatpush1.msra.mxu0 %v858
    %906 = vmatprep.subr.mxu0 0.0
    %907 = vmatpush1.msra.mxu0 %v859
    %908 = vmatprep.subr.mxu0 0.0
    %909 = vmatpush1.msra.mxu0 %v860
    %910 = vmatprep.subr.mxu0 0.0
    %911 = vmatpush1.msra.mxu0 %v861
    %912 = vmatprep.subr.mxu0 0.0
    %913 = vmatpush1.msra.mxu0 %v862
    %914 = vmatprep.subr.mxu0 0.0
    %915 = vmatpush1.msra.mxu0 %v863
    %916 = vmatprep.subr.mxu0 0.0
    %917 = vmatpush1.msra.mxu0 %v864
    %918 = vmatprep.subr.mxu0 0.0
    %919 = vmatpush1.msra.mxu0 %v865
    %920 = vmatprep.subr.mxu0 0.0
    %921 = vmatpush1.msra.mxu0 %v866
    %922 = vmatprep.subr.mxu0 0.0
    %923 = vmatpush1.msra.mxu0 %v867
    %924 = vmatprep.subr.mxu0 0.0
    %925 = vmatpush1.msra.mxu0 %v868
    %926 = vmatprep.subr.mxu0 0.0
    %927 = vmatpush1.msra.mxu0 %v869
    %928 = vmatprep.subr.mxu0 0.0
    %929 = vmatpush1.msra.mxu0 %v870
    %930 = vmatprep.subr.mxu0 0.0
    %931 = vmatpush1.msra.mxu0 %v871
    %932 = vmatprep.subr.mxu0 0.0
    %933 = vmatpush1.msra.mxu0 %v872
    %934 = vmatprep.subr.mxu0 0.0
    %935 = vmatpush1.msra.mxu0 %v873
    %936 = vmatprep.subr.mxu0 0.0
    %937 = vmatpush1.msra.mxu0 %v874
    %938 = vmatprep.subr.mxu0 0.0
    %939 = vmatpush1.msra.mxu0 %v875
    %940 = vmatprep.subr.mxu0 0.0
    %941 = vmatpush1.msra.mxu0 %v876
    %942 = vmatprep.subr.mxu0 0.0
    %943 = vmatpush1.msra.mxu0 %v877
    %944 = vmatprep.subr.mxu0 0.0
    %945 = vmatpush1.msra.mxu0 %v878
    %946 = vmatprep.subr.mxu0 0.0
    %947 = vmatpush1.msra.mxu0 %v879
    %948 = vmatprep.subr.mxu0 0.0
    %949 = vmatpush1.msra.mxu0 %v880
    %950 = vmatprep.subr.mxu0 0.0
    %951 = vmatpush1.msra.mxu0 %v881
    %952 = vmatprep.subr.mxu0 0.0
    %953 = vmatpush1.msra.mxu0 %v882
    %954 = vmatprep.mubr.f32.mxu0 %v596
    %955 = vmatmul.mubr.f32.gmra.mrb[0].mxu0 %v595
    %v956 = vpop.f32.mrb[0].mxu0
    %v957 = vadd.f32 %v888, %v956
    %v958 = vpop.f32.mrb[0].mxu0
    %959 = vmatprep.mubr.f32.mxu0 %v598
    %960 = vmatmul.mubr.f32.gmra.mrb[0].mxu0 %v597
    %v961 = vpop.f32.mrb[0].mxu0
    %v962 = vadd.f32 %v888, %v961
    %v963 = vpop.f32.mrb[0].mxu0
    %964 = vmatprep.mubr.f32.mxu0 %v600
    %965 = vmatmul.mubr.f32.gmra.mrb[0].mxu0 %v599
    %v966 = vpop.f32.mrb[0].mxu0
    %v967 = vadd.f32 %v888, %v966
    %v968 = vpop.f32.mrb[0].mxu0
    %969 = vmatprep.mubr.f32.mxu0 %v602
    %970 = vmatmul.mubr.f32.gmra.mrb[0].mxu0 %v601
    %v971 = vpop.f32.mrb[0].mxu0
    %v972 = vadd.f32 %v888, %v971
    %v973 = vpop.f32.mrb[0].mxu0
    %974 = vmatprep.mubr.f32.mxu0 %v604
    %975 = vmatmul.mubr.f32.gmra.mrb[0].mxu0 %v603
    %v976 = vpop.f32.mrb[0].mxu0
    %v977 = vadd.f32 %v888, %v976
    %v978 = vpop.f32.mrb[0].mxu0
    %979 = vmatprep.mubr.f32.mxu0 %v606
    %980 = vmatmul.mubr.f32.gmra.mrb[0].mxu0 %v605
    %v981 = vpop.f32.mrb[0].mxu0
    %v982 = vadd.f32 %v888, %v981
    %v983 = vpop.f32.mrb[0].mxu0
    %984 = vmatprep.mubr.f32.mxu0 %v608
    %985 = vmatmul.mubr.f32.gmra.mrb[0].mxu0 %v607
    %v986 = vpop.f32.mrb[0].mxu0
    %v987 = vadd.f32 %v888, %v986
    %v988 = vpop.f32.mrb[0].mxu0
    %989 = vmatprep.mubr.f32.mxu0 %v610
    %990 = vmatmul.mubr.f32.gmra.mrb[0].mxu0 %v609
    %v991 = vpop.f32.mrb[0].mxu0
    %v992 = vadd.f32 %v888, %v991
    %v993 = vpop.f32.mrb[0].mxu0
    %994 = vmatprep.mubr.f32.mxu0 %v612
    %995 = vmatmul.mubr.f32.gmra.mrb[0].mxu0 %v611
    %v996 = vpop.f32.mrb[0].mxu0
    %v997 = vadd.f32 %v888, %v996
    %v998 = vpop.f32.mrb[0].mxu0
    %999 = vmatprep.mubr.f32.mxu0 %v614
    %1000 = vmatmul.mubr.f32.gmra.mrb[0].mxu0 %v613
    %v1001 = vpop.f32.mrb[0].mxu0
    %v1002 = vadd.f32 %v888, %v1001
    %v1003 = vpop.f32.mrb[0].mxu0
    %1004 = vmatprep.mubr.f32.mxu0 %v616
    %1005 = vmatmul.mubr.f32.gmra.mrb[0].mxu0 %v615
    %v1006 = vpop.f32.mrb[0].mxu0
    %v1007 = vadd.f32 %v888, %v1006
    %v1008 = vpop.f32.mrb[0].mxu0
    %1009 = vmatprep.mubr.f32.mxu0 %v618
    %1010 = vmatmul.mubr.f32.gmra.mrb[0].mxu0 %v617
    %v1011 = vpop.f32.mrb[0].mxu0
    %v1012 = vadd.f32 %v888, %v1011
    %v1013 = vpop.f32.mrb[0].mxu0
    %1014 = vmatprep.mubr.f32.mxu0 %v620
    %1015 = vmatmul.mubr.f32.gmra.mrb[0].mxu0 %v619
    %v1016 = vpop.f32.mrb[0].mxu0
    %v1017 = vadd.f32 %v888, %v1016
    %v1018 = vpop.f32.mrb[0].mxu0
    %1019 = vmatprep.mubr.f32.mxu0 %v622
    %1020 = vmatmul.mubr.f32.gmra.mrb[0].mxu0 %v621
    %v1021 = vpop.f32.mrb[0].mxu0
    %v1022 = vadd.f32 %v888, %v1021
    %v1023 = vpop.f32.mrb[0].mxu0
    %1024 = vmatprep.mubr.f32.mxu0 %v624
    %1025 = vmatmul.mubr.f32.gmra.mrb[0].mxu0 %v623
    %v1026 = vpop.f32.mrb[0].mxu0
    %v1027 = vadd.f32 %v888, %v1026
    %v1028 = vpop.f32.mrb[0].mxu0
    %1029 = vmatprep.mubr.f32.mxu0 %v626
    %1030 = vmatmul.mubr.f32.gmra.mrb[0].mxu0 %v625
    %v1031 = vpop.f32.mrb[0].mxu0
    %v1032 = vadd.f32 %v888, %v1031
    %v1033 = vpop.f32.mrb[0].mxu0
    %1034 = vmatprep.mubr.f32.mxu0 %v628
    %1035 = vmatmul.mubr.f32.gmra.mrb[0].mxu0 %v627
    %v1036 = vpop.f32.mrb[0].mxu0
    %v1037 = vadd.f32 %v888, %v1036
    %v1038 = vpop.f32.mrb[0].mxu0
    %1039 = vmatprep.mubr.f32.mxu0 %v630
    %1040 = vmatmul.mubr.f32.gmra.mrb[0].mxu0 %v629
    %v1041 = vpop.f32.mrb[0].mxu0
    %v1042 = vadd.f32 %v888, %v1041
    %v1043 = vpop.f32.mrb[0].mxu0
    %1044 = vmatprep.mubr.f32.mxu0 %v632
    %1045 = vmatmul.mubr.f32.gmra.mrb[0].mxu0 %v631
    %v1046 = vpop.f32.mrb[0].mxu0
    %v1047 = vadd.f32 %v888, %v1046
    %v1048 = vpop.f32.mrb[0].mxu0
    %1049 = vmatprep.mubr.f32.mxu0 %v634
    %1050 = vmatmul.mubr.f32.gmra.mrb[0].mxu0 %v633
    %v1051 = vpop.f32.mrb[0].mxu0
    %v1052 = vadd.f32 %v888, %v1051
    %v1053 = vpop.f32.mrb[0].mxu0
    %1054 = vmatprep.mubr.f32.mxu0 %v636
    %1055 = vmatmul.mubr.f32.gmra.mrb[0].mxu0 %v635
    %v1056 = vpop.f32.mrb[0].mxu0
    %v1057 = vadd.f32 %v888, %v1056
    %v1058 = vpop.f32.mrb[0].mxu0
    %1059 = vmatprep.mubr.f32.mxu0 %v638
    %1060 = vmatmul.mubr.f32.gmra.mrb[0].mxu0 %v637
    %v1061 = vpop.f32.mrb[0].mxu0
    %v1062 = vadd.f32 %v888, %v1061
    %v1063 = vpop.f32.mrb[0].mxu0
    %1064 = vmatprep.mubr.f32.mxu0 %v640
    %1065 = vmatmul.mubr.f32.gmra.mrb[0].mxu0 %v639
    %v1066 = vpop.f32.mrb[0].mxu0
    %v1067 = vadd.f32 %v888, %v1066
    %v1068 = vpop.f32.mrb[0].mxu0
    %1069 = vmatprep.mubr.f32.mxu0 %v642
    %1070 = vmatmul.mubr.f32.gmra.mrb[0].mxu0 %v641
    %v1071 = vpop.f32.mrb[0].mxu0
    %v1072 = vadd.f32 %v888, %v1071
    %v1073 = vpop.f32.mrb[0].mxu0
    %1074 = vmatprep.mubr.f32.mxu0 %v644
    %1075 = vmatmul.mubr.f32.gmra.mrb[0].mxu0 %v643
    %v1076 = vpop.f32.mrb[0].mxu0
    %v1077 = vadd.f32 %v888, %v1076
    %v1078 = vpop.f32.mrb[0].mxu0
    %1079 = vmatprep.mubr.f32.mxu0 %v646
    %1080 = vmatmul.mubr.f32.gmra.mrb[0].mxu0 %v645
    %v1081 = vpop.f32.mrb[0].mxu0
    %v1082 = vadd.f32 %v888, %v1081
    %v1083 = vpop.f32.mrb[0].mxu0
    %1084 = vmatprep.mubr.f32.mxu0 %v648
    %1085 = vmatmul.mubr.f32.gmra.mrb[0].mxu0 %v647
    %v1086 = vpop.f32.mrb[0].mxu0
    %v1087 = vadd.f32 %v888, %v1086
    %v1088 = vpop.f32.mrb[0].mxu0
    %1089 = vmatprep.mubr.f32.mxu0 %v650
    %1090 = vmatmul.mubr.f32.gmra.mrb[0].mxu0 %v649
    %v1091 = vpop.f32.mrb[0].mxu0
    %v1092 = vadd.f32 %v888, %v1091
    %v1093 = vpop.f32.mrb[0].mxu0
    %1094 = vmatprep.mubr.f32.mxu0 %v652
    %1095 = vmatmul.mubr.f32.gmra.mrb[0].mxu0 %v651
    %v1096 = vpop.f32.mrb[0].mxu0
    %v1097 = vadd.f32 %v888, %v1096
    %v1098 = vpop.f32.mrb[0].mxu0
    %1099 = vmatprep.mubr.f32.mxu0 %v654
    %1100 = vmatmul.mubr.f32.gmra.mrb[0].mxu0 %v653
    %v1101 = vpop.f32.mrb[0].mxu0
    %v1102 = vadd.f32 %v888, %v1101
    %v1103 = vpop.f32.mrb[0].mxu0
    %1104 = vmatprep.mubr.f32.mxu0 %v656
    %1105 = vmatmul.mubr.f32.gmra.mrb[0].mxu0 %v655
    %v1106 = vpop.f32.mrb[0].mxu0
    %v1107 = vadd.f32 %v888, %v1106
    %v1108 = vpop.f32.mrb[0].mxu0
    %1109 = vmatprep.mubr.f32.mxu0 %v658
    %1110 = vmatmul.mubr.f32.gmra.mrb[0].mxu0 %v657
    %v1111 = vpop.f32.mrb[0].mxu0
    %v1112 = vadd.f32 %v888, %v1111
    %v1113 = vpop.f32.mrb[0].mxu0
    %1114 = vmatprep.mubr.f32.mxu0 %v660
    %1115 = vmatmul.mubr.f32.gmra.mrb[0].mxu0 %v659
    %v1116 = vpop.f32.mrb[0].mxu0
    %v1117 = vadd.f32 %v888, %v1116
    %v1118 = vpop.f32.mrb[0].mxu0
    %1119 = vmatprep.mubr.f32.mxu0 %v662
    %1120 = vmatmul.mubr.f32.gmra.mrb[0].mxu0 %v661
    %v1121 = vpop.f32.mrb[0].mxu0
    %v1122 = vadd.f32 %v888, %v1121
    %v1123 = vpop.f32.mrb[0].mxu0
    %1124 = vmatprep.mubr.f32.mxu0 %v664
    %1125 = vmatmul.mubr.f32.gmra.mrb[0].mxu0 %v663
    %v1126 = vpop.f32.mrb[0].mxu0
    %v1127 = vadd.f32 %v888, %v1126
    %v1128 = vpop.f32.mrb[0].mxu0
    %1129 = vmatprep.mubr.f32.mxu0 %v666
    %1130 = vmatmul.mubr.f32.gmra.mrb[0].mxu0 %v665
    %v1131 = vpop.f32.mrb[0].mxu0
    %v1132 = vadd.f32 %v888, %v1131
    %v1133 = vpop.f32.mrb[0].mxu0
    %1134 = vmatprep.mubr.f32.mxu0 %v668
    %1135 = vmatmul.mubr.f32.gmra.mrb[0].mxu0 %v667
    %v1136 = vpop.f32.mrb[0].mxu0
    %v1137 = vadd.f32 %v888, %v1136
    %v1138 = vpop.f32.mrb[0].mxu0
    %1139 = vmatprep.mubr.f32.mxu0 %v670
    %1140 = vmatmul.mubr.f32.gmra.mrb[0].mxu0 %v669
    %v1141 = vpop.f32.mrb[0].mxu0
    %v1142 = vadd.f32 %v888, %v1141
    %v1143 = vpop.f32.mrb[0].mxu0
    %1144 = vmatprep.mubr.f32.mxu0 %v672
    %1145 = vmatmul.mubr.f32.gmra.mrb[0].mxu0 %v671
    %v1146 = vpop.f32.mrb[0].mxu0
    %v1147 = vadd.f32 %v888, %v1146
    %v1148 = vpop.f32.mrb[0].mxu0
    %1149 = vmatprep.mubr.f32.mxu0 %v674
    %1150 = vmatmul.mubr.f32.gmra.mrb[0].mxu0 %v673
    %v1151 = vpop.f32.mrb[0].mxu0
    %v1152 = vadd.f32 %v888, %v1151
    %v1153 = vpop.f32.mrb[0].mxu0
    %1154 = vmatprep.mubr.f32.mxu0 %v676
    %1155 = vmatmul.mubr.f32.gmra.mrb[0].mxu0 %v675
    %v1156 = vpop.f32.mrb[0].mxu0
    %v1157 = vadd.f32 %v888, %v1156
    %v1158 = vpop.f32.mrb[0].mxu0
    %1159 = vmatprep.mubr.f32.mxu0 %v678
    %1160 = vmatmul.mubr.f32.gmra.mrb[0].mxu0 %v677
    %v1161 = vpop.f32.mrb[0].mxu0
    %v1162 = vadd.f32 %v888, %v1161
    %v1163 = vpop.f32.mrb[0].mxu0
    %1164 = vmatprep.mubr.f32.mxu0 %v680
    %1165 = vmatmul.mubr.f32.gmra.mrb[0].mxu0 %v679
    %v1166 = vpop.f32.mrb[0].mxu0
    %v1167 = vadd.f32 %v888, %v1166
    %v1168 = vpop.f32.mrb[0].mxu0
    %1169 = vmatprep.mubr.f32.mxu0 %v682
    %1170 = vmatmul.mubr.f32.gmra.mrb[0].mxu0 %v681
    %v1171 = vpop.f32.mrb[0].mxu0
    %v1172 = vadd.f32 %v888, %v1171
    %v1173 = vpop.f32.mrb[0].mxu0
    %1174 = vmatprep.mubr.f32.mxu0 %v684
    %1175 = vmatmul.mubr.f32.gmra.mrb[0].mxu0 %v683
    %v1176 = vpop.f32.mrb[0].mxu0
    %v1177 = vadd.f32 %v888, %v1176
    %v1178 = vpop.f32.mrb[0].mxu0
    %1179 = vmatprep.mubr.f32.mxu0 %v686
    %1180 = vmatmul.mubr.f32.gmra.mrb[0].mxu0 %v685
    %v1181 = vpop.f32.mrb[0].mxu0
    %v1182 = vadd.f32 %v888, %v1181
    %v1183 = vpop.f32.mrb[0].mxu0
    %1184 = vmatprep.mubr.f32.mxu0 %v688
    %1185 = vmatmul.mubr.f32.gmra.mrb[0].mxu0 %v687
    %v1186 = vpop.f32.mrb[0].mxu0
    %v1187 = vadd.f32 %v888, %v1186
    %v1188 = vpop.f32.mrb[0].mxu0
    %1189 = vmatprep.mubr.f32.mxu0 %v690
    %1190 = vmatmul.mubr.f32.gmra.mrb[0].mxu0 %v689
    %v1191 = vpop.f32.mrb[0].mxu0
    %v1192 = vadd.f32 %v888, %v1191
    %v1193 = vpop.f32.mrb[0].mxu0
    %1194 = vmatprep.mubr.f32.mxu0 %v692
    %1195 = vmatmul.mubr.f32.gmra.mrb[0].mxu0 %v691
    %v1196 = vpop.f32.mrb[0].mxu0
    %v1197 = vadd.f32 %v888, %v1196
    %v1198 = vpop.f32.mrb[0].mxu0
    %1199 = vmatprep.mubr.f32.mxu0 %v694
    %1200 = vmatmul.mubr.f32.gmra.mrb[0].mxu0 %v693
    %v1201 = vpop.f32.mrb[0].mxu0
    %v1202 = vadd.f32 %v888, %v1201
    %v1203 = vpop.f32.mrb[0].mxu0
    %1204 = vmatprep.mubr.f32.mxu0 %v696
    %1205 = vmatmul.mubr.f32.gmra.mrb[0].mxu0 %v695
    %v1206 = vpop.f32.mrb[0].mxu0
    %v1207 = vadd.f32 %v888, %v1206
    %v1208 = vpop.f32.mrb[0].mxu0
    %1209 = vmatprep.mubr.f32.mxu0 %v698
    %1210 = vmatmul.mubr.f32.gmra.mrb[0].mxu0 %v697
    %v1211 = vpop.f32.mrb[0].mxu0
    %v1212 = vadd.f32 %v888, %v1211
    %v1213 = vpop.f32.mrb[0].mxu0
    %1214 = vmatprep.mubr.f32.mxu0 %v700
    %1215 = vmatmul.mubr.f32.gmra.mrb[0].mxu0 %v699
    %v1216 = vpop.f32.mrb[0].mxu0
    %v1217 = vadd.f32 %v888, %v1216
    %v1218 = vpop.f32.mrb[0].mxu0
    %1219 = vmatprep.mubr.f32.mxu0 %v702
    %1220 = vmatmul.mubr.f32.gmra.mrb[0].mxu0 %v701
    %v1221 = vpop.f32.mrb[0].mxu0
    %v1222 = vadd.f32 %v888, %v1221
    %v1223 = vpop.f32.mrb[0].mxu0
    %1224 = vmatprep.mubr.f32.mxu0 %v704
    %1225 = vmatmul.mubr.f32.gmra.mrb[0].mxu0 %v703
    %v1226 = vpop.f32.mrb[0].mxu0
    %v1227 = vadd.f32 %v888, %v1226
    %v1228 = vpop.f32.mrb[0].mxu0
    %1229 = vmatprep.mubr.f32.mxu0 %v706
    %1230 = vmatmul.mubr.f32.gmra.mrb[0].mxu0 %v705
    %v1231 = vpop.f32.mrb[0].mxu0
    %v1232 = vadd.f32 %v888, %v1231
    %v1233 = vpop.f32.mrb[0].mxu0
    %1234 = vmatprep.mubr.f32.mxu0 %v708
    %1235 = vmatmul.mubr.f32.gmra.mrb[0].mxu0 %v707
    %v1236 = vpop.f32.mrb[0].mxu0
    %v1237 = vadd.f32 %v888, %v1236
    %v1238 = vpop.f32.mrb[0].mxu0
    %1239 = vmatprep.mubr.f32.mxu0 %v710
    %1240 = vmatmul.mubr.f32.gmra.mrb[0].mxu0 %v709
    %v1241 = vpop.f32.mrb[0].mxu0
    %v1242 = vadd.f32 %v888, %v1241
    %v1243 = vpop.f32.mrb[0].mxu0
    %1244 = vmatprep.mubr.f32.mxu0 %v712
    %1245 = vmatmul.mubr.f32.gmra.mrb[0].mxu0 %v711
    %v1246 = vpop.f32.mrb[0].mxu0
    %v1247 = vadd.f32 %v888, %v1246
    %v1248 = vpop.f32.mrb[0].mxu0
    %1249 = vmatprep.mubr.f32.mxu0 %v714
    %1250 = vmatmul.mubr.f32.gmra.mrb[0].mxu0 %v713
    %v1251 = vpop.f32.mrb[0].mxu0
    %v1252 = vadd.f32 %v888, %v1251
    %v1253 = vpop.f32.mrb[0].mxu0
    %1254 = vmatprep.mubr.f32.mxu0 %v716
    %1255 = vmatmul.mubr.f32.gmra.mrb[0].mxu0 %v715
    %v1256 = vpop.f32.mrb[0].mxu0
    %v1257 = vadd.f32 %v888, %v1256
    %v1258 = vpop.f32.mrb[0].mxu0
    %1259 = vmatprep.mubr.f32.mxu0 %v718
    %1260 = vmatmul.mubr.f32.gmra.mrb[0].mxu0 %v717
    %v1261 = vpop.f32.mrb[0].mxu0
    %v1262 = vadd.f32 %v888, %v1261
    %v1263 = vpop.f32.mrb[0].mxu0
    %1264 = vmatprep.mubr.f32.mxu0 %v720
    %1265 = vmatmul.mubr.f32.gmra.mrb[0].mxu0 %v719
    %v1266 = vpop.f32.mrb[0].mxu0
    %v1267 = vadd.f32 %v888, %v1266
    %v1268 = vpop.f32.mrb[0].mxu0
    %1269 = vmatprep.mubr.f32.mxu0 %v722
    %1270 = vmatmul.mubr.f32.gmra.mrb[0].mxu0 %v721
    %v1271 = vpop.f32.mrb[0].mxu0
    %v1272 = vadd.f32 %v888, %v1271
    %v1273 = vpop.f32.mrb[0].mxu0
    %1274 = vdwg.mxu0
    %1275 = vst [vmem:[#allocation6] sm:$0xff] %v957
    %1276 = vst [vmem:[#allocation6 + $0x8] sm:$0xff] %v962
    %1277 = vst [vmem:[#allocation6 + $0x10] sm:$0xff] %v967
    %1278 = vst [vmem:[#allocation6 + $0x18] sm:$0xff] %v972
    %1279 = vst [vmem:[#allocation6 + $0x20] sm:$0xff] %v977
    %1280 = vst [vmem:[#allocation6 + $0x28] sm:$0xff] %v982
    %1281 = vst [vmem:[#allocation6 + $0x30] sm:$0xff] %v987
    %1282 = vst [vmem:[#allocation6 + $0x38] sm:$0xff] %v992
    %1283 = vst [vmem:[#allocation6 + $0x40] sm:$0xff] %v997
    %1284 = vst [vmem:[#allocation6 + $0x48] sm:$0xff] %v1002
    %1285 = vst [vmem:[#allocation6 + $0x50] sm:$0xff] %v1007
    %1286 = vst [vmem:[#allocation6 + $0x58] sm:$0xff] %v1012
    %1287 = vst [vmem:[#allocation6 + $0x60] sm:$0xff] %v1017
    %1288 = vst [vmem:[#allocation6 + $0x68] sm:$0xff] %v1022
    %1289 = vst [vmem:[#allocation6 + $0x70] sm:$0xff] %v1027
    %1290 = vst [vmem:[#allocation6 + $0x78] sm:$0xff] %v1032
    %1291 = vst [vmem:[#allocation6 + $0x80] sm:$0xff] %v1037
    %1292 = vst [vmem:[#allocation6 + $0x88] sm:$0xff] %v1042
    %1293 = vst [vmem:[#allocation6 + $0x90] sm:$0xff] %v1047
    %1294 = vst [vmem:[#allocation6 + $0x98] sm:$0xff] %v1052
    %1295 = vst [vmem:[#allocation6 + $0xa0] sm:$0xff] %v1057
    %1296 = vst [vmem:[#allocation6 + $0xa8] sm:$0xff] %v1062
    %1297 = vst [vmem:[#allocation6 + $0xb0] sm:$0xff] %v1067
    %1298 = vst [vmem:[#allocation6 + $0xb8] sm:$0xff] %v1072
    %1299 = vst [vmem:[#allocation6 + $0xc0] sm:$0xff] %v1077
    %1300 = vst [vmem:[#allocation6 + $0xc8] sm:$0xff] %v1082
    %1301 = vst [vmem:[#allocation6 + $0xd0] sm:$0xff] %v1087
    %1302 = vst [vmem:[#allocation6 + $0xd8] sm:$0xff] %v1092
    %1303 = vst [vmem:[#allocation6 + $0xe0] sm:$0xff] %v1097
    %1304 = vst [vmem:[#allocation6 + $0xe8] sm:$0xff] %v1102
    %1305 = vst [vmem:[#allocation6 + $0xf0] sm:$0xff] %v1107
    %1306 = vst [vmem:[#allocation6 + $0xf8] sm:$0xff] %v1112
    %1307 = vst [vmem:[#allocation6 + $0x100] sm:$0xff] %v1117
    %1308 = vst [vmem:[#allocation6 + $0x108] sm:$0xff] %v1122
    %1309 = vst [vmem:[#allocation6 + $0x110] sm:$0xff] %v1127
    %1310 = vst [vmem:[#allocation6 + $0x118] sm:$0xff] %v1132
    %1311 = vst [vmem:[#allocation6 + $0x120] sm:$0xff] %v1137
    %1312 = vst [vmem:[#allocation6 + $0x128] sm:$0xff] %v1142
    %1313 = vst [vmem:[#allocation6 + $0x130] sm:$0xff] %v1147
    %1314 = vst [vmem:[#allocation6 + $0x138] sm:$0xff] %v1152
    %1315 = vst [vmem:[#allocation6 + $0x140] sm:$0xff] %v1157
    %1316 = vst [vmem:[#allocation6 + $0x148] sm:$0xff] %v1162
    %1317 = vst [vmem:[#allocation6 + $0x150] sm:$0xff] %v1167
    %1318 = vst [vmem:[#allocation6 + $0x158] sm:$0xff] %v1172
    %1319 = vst [vmem:[#allocation6 + $0x160] sm:$0xff] %v1177
    %1320 = vst [vmem:[#allocation6 + $0x168] sm:$0xff] %v1182
    %1321 = vst [vmem:[#allocation6 + $0x170] sm:$0xff] %v1187
    %1322 = vst [vmem:[#allocation6 + $0x178] sm:$0xff] %v1192
    %1323 = vst [vmem:[#allocation6 + $0x180] sm:$0xff] %v1197
    %1324 = vst [vmem:[#allocation6 + $0x188] sm:$0xff] %v1202
    %1325 = vst [vmem:[#allocation6 + $0x190] sm:$0xff] %v1207
    %1326 = vst [vmem:[#allocation6 + $0x198] sm:$0xff] %v1212
    %1327 = vst [vmem:[#allocation6 + $0x1a0] sm:$0xff] %v1217
    %1328 = vst [vmem:[#allocation6 + $0x1a8] sm:$0xff] %v1222
    %1329 = vst [vmem:[#allocation6 + $0x1b0] sm:$0xff] %v1227
    %1330 = vst [vmem:[#allocation6 + $0x1b8] sm:$0xff] %v1232
    %1331 = vst [vmem:[#allocation6 + $0x1c0] sm:$0xff] %v1237
    %1332 = vst [vmem:[#allocation6 + $0x1c8] sm:$0xff] %v1242
    %1333 = vst [vmem:[#allocation6 + $0x1d0] sm:$0xff] %v1247
    %1334 = vst [vmem:[#allocation6 + $0x1d8] sm:$0xff] %v1252
    %1335 = vst [vmem:[#allocation6 + $0x1e0] sm:$0xff] %v1257
    %1336 = vst [vmem:[#allocation6 + $0x1e8] sm:$0xff] %v1262
    %1337 = vst [vmem:[#allocation6 + $0x1f0] sm:$0xff] %v1267
    %1338 = vst [vmem:[#allocation6 + $0x1f8] sm:$0xff] %v1272
    // Predicated region
    $region26: #{autoencoder_forward.1} parent=1 // pred_check
      _
    $region27: #{autoencoder_forward.1} parent=1 // pred_check_branch
      %1340 = sbr.rel (0) target = $region29
    $region28: #{autoencoder_forward.1} parent=1 // pred_region
      %s1342 = ssub.s32 16384, 16384
      %1343 = vsyncadd [#allocation4], %s1342
      %s1344 = sshll.u32 [#allocation5], 4
      %s1345 = int_to_ptr.vmem [resolvable:$true] %s1344
      %1350 = dma.vmem_to_hbm [thread:$0]  %s1345, 16384, %s5, [#allocation4], 256, 256, 16
    $region29: #{autoencoder_forward.1} parent=1 // pred_fallthru
      _
    // Predicated region
    $region30: #{autoencoder_forward.1} parent=1 // pred_check
      _
    $region31: #{autoencoder_forward.1} parent=1 // pred_check_branch
      %1352 = sbr.rel (0) target = $region33
    $region32: #{autoencoder_forward.1} parent=1 // pred_region
      %s1354 = ssub.s32 8192, 8192
      %1355 = vsyncadd [#allocation7], %s1354
      %s1356 = sshll.u32 [#allocation6], 4
      %s1357 = int_to_ptr.vmem [resolvable:$true] %s1356
      %1362 = dma.vmem_to_hbm [thread:$0]  %s1357, 8192, %s6, [#allocation7], 128, 128, 8
    $region33: #{autoencoder_forward.1} parent=1 // pred_fallthru
      _
    // Predicated region
    $region34: #{autoencoder_forward.1} parent=1 // pred_check
      _
    $region35: #{autoencoder_forward.1} parent=1 // pred_check_branch
      %1364 = sbr.rel (0) target = $region37
    $region36: #{autoencoder_forward.1} parent=1 // pred_region
      %1365 = dma.done [#allocation4], 16384
    $region37: #{autoencoder_forward.1} parent=1 // pred_fallthru
      _
    // Predicated region
    $region38: #{autoencoder_forward.1} parent=1 // pred_check
      _
    $region39: #{autoencoder_forward.1} parent=1 // pred_check_branch
      %1367 = sbr.rel (0) target = $region41
    $region40: #{autoencoder_forward.1} parent=1 // pred_region
      %1368 = dma.done [#allocation7], 8192
    $region41: #{autoencoder_forward.1} parent=1 // pred_fallthru
      _
    %1369 = vsyncpa [#allocation3], 1
    %1370 = vsyncpa [#allocation4], 1
    %1371 = vsyncpa [#allocation7], 1

</llo_original>
